<compile_context>
chip_gen: v5e
topology: v5e:2x2
jax: 0.10.0
libtpu: 0.0.40
codegen_flags: <defaults>
</compile_context>

<pallas_src>
import functools
import math

import jax
import jax.numpy as jnp
from jax import lax
from jax.experimental import pallas as pl
from jax.experimental.pallas import tpu as pltpu


# ------------------------------ fused kernel --------------------------------

def _layer_norm(y, g, b):                     # eps = 1e-5 (PyTorch default)
    mu = jnp.mean(y, axis=-1, keepdims=True)
    var = jnp.mean(jnp.square(y - mu), axis=-1, keepdims=True)
    return (y - mu) * lax.rsqrt(var + 1e-5) * g + b


def _fused_model_kernel(h_ref, rep_ref, bdm_ref, a_ref, c1_ref, c2t_ref,
                        sb_ref, wvo_ref, bvo_ref, fold_ref, bo_ref,
                        g1_ref, beta1_ref, w1_ref, b1_ref, w2_ref, b2_ref,
                        g2_ref, beta2_ref, o_ref, *, num_layers, num_head):
    M, D = h_ref.shape                        # M = batch * seq_len
    H = num_head

    h = h_ref[...]
    rep_eye = rep_ref[...]                    # (D, H*D)   [I_D I_D ... I_D]
    bd_mask = bdm_ref[...]                    # (M*H, H*D) block-diagonal 0/1
    A, C1, C2T, SB = a_ref[...], c1_ref[...], c2t_ref[...], sb_ref[...]
    WVO, BVO, FOLD = wvo_ref[...], bvo_ref[...], fold_ref[...]
    bo = bo_ref[...]
    g1, beta1 = g1_ref[...], beta1_ref[...]
    w1, b1 = w1_ref[...], b1_ref[...]
    w2, b2 = w2_ref[...], b2_ref[...]
    g2, beta2 = g2_ref[...], beta2_ref[...]

    for _ in range(num_layers):               # encoders share (deep-copied) weights
        # ---- block-diag replica: hbd[M*c + r, D*e + j] = (c==e) * h[r, j] ----
        h_rep = jnp.concatenate([h] * H, axis=0)                      # (MH, D)
        hbd = jnp.dot(h_rep, rep_eye,
                      preferred_element_type=jnp.float32) * bd_mask   # (MH, HD)

        # ---- scores of the chunk-stacked attention (scale + group mask and
        #      all q/k bias terms are pre-folded into A / C1 / C2T / SB) ----
        s = lax.dot_general(
            jnp.dot(hbd, A, preferred_element_type=jnp.float32) + C2T,
            hbd, (((1,), (1,)), ((), ())),            # "NT" matmul, no transpose op
            preferred_element_type=jnp.float32)
        s = s + jnp.dot(hbd, C1, preferred_element_type=jnp.float32) + SB

        m = jnp.max(s, axis=-1, keepdims=True)        # stable softmax
        e = jnp.exp(s - m)
        p = e * pl.reciprocal(jnp.sum(e, axis=-1, keepdims=True), approx=True)

        # ---- context + un-stack + output projection fused through WVO/BVO ----
        z = jnp.dot(hbd, WVO, preferred_element_type=jnp.float32) + BVO   # (MH, HD)
        y = jnp.dot(p, z, preferred_element_type=jnp.float32) * bd_mask   # (MH, HD)
        yf = jnp.dot(y, FOLD, preferred_element_type=jnp.float32)         # (MH, D)
        attn = bo
        for c in range(H):                     # sublane-aligned row-block fold
            attn = attn + yf[c * M:(c + 1) * M, :]

        h = _layer_norm(attn + h, g1, beta1)   # residual + LayerNorm

        # ---- position-wise feed forward (hidden stays in VMEM) ----
        hid = jnp.maximum(
            jnp.dot(h, w1, preferred_element_type=jnp.float32) + b1, 0.0)
        ff = jnp.dot(hid, w2, preferred_element_type=jnp.float32) + b2
        h = _layer_norm(ff + h, g2, beta2)

    o_ref[...] = h


# -------------------- host-side, one-time weight folding --------------------

def fold_params(params, batch, seq_len, num_head):
    """Fold the (layer-shared) encoder weights into the matrices consumed by
    the fused kernel: chunk-stacked weight products, bias cross-terms, the
    additive softmax-group mask (scale folded in) and the Wv@Wo fusion."""
    enc = params["encoder"]
    D = enc["w_q"].shape[0]
    H = num_head
    dh = D // H
    M = batch * seq_len
    scale = dh ** (-0.5)

    wq, wk, wv, wo = enc["w_q"], enc["w_k"], enc["w_v"], enc["w_o"]
    bq, bk, bv = enc["b_q"][0], enc["b_k"][0], enc["b_v"][0]

    def stack_w(w):    # (D, D) -> (H*D, dh): row block c = W[:, c*dh:(c+1)*dh]
        return jnp.concatenate([w[:, c * dh:(c + 1) * dh] for c in range(H)], 0)

    def stack_b(b):    # (D,)  -> (M*H, dh): rows M*c..M*(c+1) = b[c*dh:(c+1)*dh]
        return jnp.concatenate(
            [jnp.broadcast_to(b[c * dh:(c + 1) * dh][None, :], (M, dh))
             for c in range(H)], 0)

    wqs, wks, wvs = stack_w(wq), stack_w(wk), stack_w(wv)
    bqs, bks, bvs = stack_b(bq), stack_b(bk), stack_b(bv)

    # group id of each stacked row (index M*c + r), exactly matching the
    # row-major reinterpretation  Q.view(B*H, -1, dh)  of the PyTorch code.
    r = jnp.arange(M)
    c = jnp.arange(H)
    flat = ((r // seq_len) * seq_len * D + (r % seq_len) * D)[None, :] \
        + (c * dh)[:, None]                                    # (H, M)
    group = (flat // (seq_len * dh)).reshape(M * H)
    mask_bias = jnp.where(group[:, None] == group[None, :], 0.0, -1e30)

    eye = jnp.eye(D, dtype=jnp.float32)
    row_blk = jnp.arange(M * H) // M
    col_blk = jnp.arange(H * D) // D
    bd_mask = (row_blk[:, None] == col_blk[None, :]).astype(jnp.float32)

    wvo = jnp.concatenate([wvs @ wo[c * dh:(c + 1) * dh, :] for c in range(H)], 1)
    bvo = jnp.concatenate([bvs @ wo[c * dh:(c + 1) * dh, :] for c in range(H)], 1)

    return {
        "rep_eye": jnp.concatenate([eye] * H, axis=1),         # (D, H*D)
        "bd_mask": bd_mask,                                    # (M*H, H*D)
        "A": scale * wqs @ wks.T,                              # (H*D, H*D)
        "C1": scale * wqs @ bks.T,                             # (H*D, M*H)
        "C2T": scale * bqs @ wks.T,                            # (M*H, H*D)
        "SB": scale * bqs @ bks.T + mask_bias,                 # (M*H, M*H)
        "WVO": wvo,                                            # (H*D, H*D)
        "BVO": bvo,                                            # (M*H, H*D)
        "FOLD": jnp.concatenate([eye] * H, axis=0),            # (H*D, D)
        "bo": enc["b_o"],
        "ln1_g": enc["ln1_g"], "ln1_b": enc["ln1_b"],
        "w1": enc["w1"], "b1": enc["b1"],
        "w2": enc["w2"], "b2": enc["b2"],
        "ln2_g": enc["ln2_g"], "ln2_b": enc["ln2_b"],
        "pe": params["pe"],
    }


# --------------------------------- wrapper -----------------------------------

def model_forward(folded, x, num_head, num_layers):
    B, L, D = x.shape
    M = B * L
    # positional encoding (dropout = identity) added by XLA, not in the kernel
    h0 = (x + folded["pe"][None, :, :]).reshape(M, D)

    args = (h0, folded["rep_eye"], folded["bd_mask"], folded["A"],
            folded["C1"], folded["C2T"], folded["SB"], folded["WVO"],
            folded["BVO"], folded["FOLD"], folded["bo"],
            folded["ln1_g"], folded["ln1_b"], folded["w1"], folded["b1"],
            folded["w2"], folded["b2"], folded["ln2_g"], folded["ln2_b"])

    out = pl.pallas_call(
        functools.partial(_fused_model_kernel,
                          num_layers=num_layers, num_head=num_head),
        out_shape=jax.ShapeDtypeStruct((M, D), jnp.float32),
        grid=(1,),
        in_specs=[pl.BlockSpec(a.shape, lambda i: (0, 0)) for a in args],
        out_specs=pl.BlockSpec((M, D), lambda i: (0, 0)),
        compiler_params=pltpu.CompilerParams(
            dimension_semantics=("arbitrary",)),
    )(*args)
    return out.reshape(B, L * D)               # free row-major reshape in XLA


# ------------------------------ parameters ----------------------------------

def init_linear_params(key, din, dout):
    # nn.Linear default init: U(-1/sqrt(fan_in), 1/sqrt(fan_in)).
    k1, k2 = jax.random.split(key)
    bound = 1.0 / math.sqrt(din)
    w = jax.random.uniform(k1, (din, dout), jnp.float32, -bound, bound)
    b = jax.random.uniform(k2, (1, dout), jnp.float32, -bound, bound)
    return w, b


def init_encoder_params(key, dim_model, hidden):
    keys = jax.random.split(key, 6)
    wq, bq = init_linear_params(keys[0], dim_model, dim_model)
    wk, bk = init_linear_params(keys[1], dim_model, dim_model)
    wv, bv = init_linear_params(keys[2], dim_model, dim_model)
    wo, bo = init_linear_params(keys[3], dim_model, dim_model)
    w1, b1 = init_linear_params(keys[4], dim_model, hidden)
    w2, b2 = init_linear_params(keys[5], hidden, dim_model)
    return {
        "w_q": wq, "b_q": bq, "w_k": wk, "b_k": bk, "w_v": wv, "b_v": bv,
        "w_o": wo, "b_o": bo,
        "ln1_g": jnp.ones((1, dim_model), jnp.float32),
        "ln1_b": jnp.zeros((1, dim_model), jnp.float32),
        "w1": w1, "b1": b1, "w2": w2, "b2": b2,
        "ln2_g": jnp.ones((1, dim_model), jnp.float32),
        "ln2_b": jnp.zeros((1, dim_model), jnp.float32),
    }


def positional_encoding(pad_size, embed):
    pos = jnp.arange(pad_size, dtype=jnp.float32)[:, None]
    i = jnp.arange(embed)
    angle = pos / jnp.power(10000.0, (i // 2 * 2.0) / embed)
    pe = jnp.where(i % 2 == 0, jnp.sin(angle), jnp.cos(angle))
    return pe.astype(jnp.float32)              # (pad_size, embed)


# --------------------- pure-JAX reference (for self-check) ------------------

def _reference_forward(params, x, num_head, num_layers):
    B, L, D = x.shape
    dh = D // num_head
    M = B * L
    enc = params["encoder"]

    def ln(y, g, b):
        mu = y.mean(-1, keepdims=True)
        var = ((y - mu) ** 2).mean(-1, keepdims=True)
        return (y - mu) / jnp.sqrt(var + 1e-5) * g + b

    h = (x + params["pe"][None, :, :]).reshape(M, D)
    for _ in range(num_layers):
        q = h @ enc["w_q"] + enc["b_q"]
        k = h @ enc["w_k"] + enc["b_k"]
        v = h @ enc["w_v"] + enc["b_v"]
        q3 = q.reshape(B * num_head, -1, dh)   # exact PyTorch .view() semantics
        k3 = k.reshape(B * num_head, -1, dh)
        v3 = v.reshape(B * num_head, -1, dh)
        s = jnp.einsum("bij,bkj->bik", q3, k3) * (dh ** -0.5)
        a = jax.nn.softmax(s, axis=-1)
        ctx = jnp.einsum("bik,bkd->bid", a, v3).reshape(M, D)
        h = ln(ctx @ enc["w_o"] + enc["b_o"] + h, enc["ln1_g"], enc["ln1_b"])
        hid = jnp.maximum(h @ enc["w1"] + enc["b1"], 0.0)
        h = ln(hid @ enc["w2"] + enc["b2"] + h, enc["ln2_g"], enc["ln2_b"])
    return h.reshape(B, L * D)


# --------------------------------- main --------------------------------------

if __name__ == "__main__":
    # config: embedding_size=32, trf_heads=4, trf_layers=2, pad_num=8
    B, L, D = 2, 8, 32
    num_head, num_layers, hidden = 4, 2, 1024

    key = jax.random.PRNGKey(0)
    k_x, k_enc = jax.random.split(key)
    x = jax.random.normal(k_x, (B, L, D), dtype=jnp.float32)

    params = {
        "pe": positional_encoding(L, D),
        "encoder": init_encoder_params(k_enc, D, hidden),
    }
    # host-side, one-time folding (weights are shared across the deep-copied
    # encoder layers, so this is done exactly once).
    folded = fold_params(params, B, L, num_head)

    fwd = jax.jit(functools.partial(model_forward,
                                    num_head=num_head, num_layers=num_layers))
    out = fwd(folded, x)
    jax.block_until_ready(out)
    assert out.shape == (B, L * D)

    # numerical self-check against a plain-JAX replica of the PyTorch graph
    ref = _reference_forward(params, x, num_head, num_layers)
    err = float(jnp.max(jnp.abs(out - ref)))
    assert err < 5e-2, f"kernel/reference mismatch: max abs err = {err}"

    print("KERNEL_OK")
</pallas_src>

<mosaic_0001>
module attributes {stable_mosaic.version = 11 : i64} {
  func.func @_fused_model_kernel(%arg0: i32, %arg1: memref<16x32xf32, #tpu.memory_space<vmem>>, %arg2: memref<32x128xf32, #tpu.memory_space<vmem>>, %arg3: memref<64x128xf32, #tpu.memory_space<vmem>>, %arg4: memref<128x128xf32, #tpu.memory_space<vmem>>, %arg5: memref<128x64xf32, #tpu.memory_space<vmem>>, %arg6: memref<64x128xf32, #tpu.memory_space<vmem>>, %arg7: memref<64x64xf32, #tpu.memory_space<vmem>>, %arg8: memref<128x128xf32, #tpu.memory_space<vmem>>, %arg9: memref<64x128xf32, #tpu.memory_space<vmem>>, %arg10: memref<128x32xf32, #tpu.memory_space<vmem>>, %arg11: memref<1x32xf32, #tpu.memory_space<vmem>>, %arg12: memref<1x32xf32, #tpu.memory_space<vmem>>, %arg13: memref<1x32xf32, #tpu.memory_space<vmem>>, %arg14: memref<32x1024xf32, #tpu.memory_space<vmem>>, %arg15: memref<1x1024xf32, #tpu.memory_space<vmem>>, %arg16: memref<1024x32xf32, #tpu.memory_space<vmem>>, %arg17: memref<1x32xf32, #tpu.memory_space<vmem>>, %arg18: memref<1x32xf32, #tpu.memory_space<vmem>>, %arg19: memref<1x32xf32, #tpu.memory_space<vmem>>, %arg20: memref<16x32xf32, #tpu.memory_space<vmem>>) attributes {dimension_semantics = [#tpu.dimension_semantics<arbitrary>], iteration_bounds = array<i64: 1>, scalar_prefetch = 0 : i64, scratch_operands = 0 : i64, tpu.core_type = #tpu.core_type<tc>, window_params = [{pipeline_mode = #tpu.pipeline_mode<synchronous>, transform_indices = @transform_0, window_bounds = array<i64: 16, 32>}, {pipeline_mode = #tpu.pipeline_mode<synchronous>, transform_indices = @transform_1, window_bounds = array<i64: 32, 128>}, {pipeline_mode = #tpu.pipeline_mode<synchronous>, transform_indices = @transform_2, window_bounds = array<i64: 64, 128>}, {pipeline_mode = #tpu.pipeline_mode<synchronous>, transform_indices = @transform_3, window_bounds = array<i64: 128, 128>}, {pipeline_mode = #tpu.pipeline_mode<synchronous>, transform_indices = @transform_4, window_bounds = array<i64: 128, 64>}, {pipeline_mode = #tpu.pipeline_mode<synchronous>, transform_indices = @transform_5, window_bounds = array<i64: 64, 128>}, {pipeline_mode = #tpu.pipeline_mode<synchronous>, transform_indices = @transform_6, window_bounds = array<i64: 64, 64>}, {pipeline_mode = #tpu.pipeline_mode<synchronous>, transform_indices = @transform_7, window_bounds = array<i64: 128, 128>}, {pipeline_mode = #tpu.pipeline_mode<synchronous>, transform_indices = @transform_8, window_bounds = array<i64: 64, 128>}, {pipeline_mode = #tpu.pipeline_mode<synchronous>, transform_indices = @transform_9, window_bounds = array<i64: 128, 32>}, {pipeline_mode = #tpu.pipeline_mode<synchronous>, transform_indices = @transform_10, window_bounds = array<i64: 1, 32>}, {pipeline_mode = #tpu.pipeline_mode<synchronous>, transform_indices = @transform_11, window_bounds = array<i64: 1, 32>}, {pipeline_mode = #tpu.pipeline_mode<synchronous>, transform_indices = @transform_12, window_bounds = array<i64: 1, 32>}, {pipeline_mode = #tpu.pipeline_mode<synchronous>, transform_indices = @transform_13, window_bounds = array<i64: 32, 1024>}, {pipeline_mode = #tpu.pipeline_mode<synchronous>, transform_indices = @transform_14, window_bounds = array<i64: 1, 1024>}, {pipeline_mode = #tpu.pipeline_mode<synchronous>, transform_indices = @transform_15, window_bounds = array<i64: 1024, 32>}, {pipeline_mode = #tpu.pipeline_mode<synchronous>, transform_indices = @transform_16, window_bounds = array<i64: 1, 32>}, {pipeline_mode = #tpu.pipeline_mode<synchronous>, transform_indices = @transform_17, window_bounds = array<i64: 1, 32>}, {pipeline_mode = #tpu.pipeline_mode<synchronous>, transform_indices = @transform_18, window_bounds = array<i64: 1, 32>}, {pipeline_mode = #tpu.pipeline_mode<synchronous>, transform_indices = @transform_19, window_bounds = array<i64: 16, 32>}]} {
    %c0 = arith.constant 0 : index
    %c0_0 = arith.constant 0 : index
    %0 = vector.load %arg1[%c0, %c0_0] : memref<16x32xf32, #tpu.memory_space<vmem>>, vector<16x32xf32>
    %c0_1 = arith.constant 0 : index
    %c0_2 = arith.constant 0 : index
    %1 = vector.load %arg2[%c0_1, %c0_2] : memref<32x128xf32, #tpu.memory_space<vmem>>, vector<32x128xf32>
    %c0_3 = arith.constant 0 : index
    %c0_4 = arith.constant 0 : index
    %2 = vector.load %arg3[%c0_3, %c0_4] : memref<64x128xf32, #tpu.memory_space<vmem>>, vector<64x128xf32>
    %c0_5 = arith.constant 0 : index
    %c0_6 = arith.constant 0 : index
    %3 = vector.load %arg4[%c0_5, %c0_6] : memref<128x128xf32, #tpu.memory_space<vmem>>, vector<128x128xf32>
    %c0_7 = arith.constant 0 : index
    %c0_8 = arith.constant 0 : index
    %4 = vector.load %arg5[%c0_7, %c0_8] : memref<128x64xf32, #tpu.memory_space<vmem>>, vector<128x64xf32>
    %c0_9 = arith.constant 0 : index
    %c0_10 = arith.constant 0 : index
    %5 = vector.load %arg6[%c0_9, %c0_10] : memref<64x128xf32, #tpu.memory_space<vmem>>, vector<64x128xf32>
    %c0_11 = arith.constant 0 : index
    %c0_12 = arith.constant 0 : index
    %6 = vector.load %arg7[%c0_11, %c0_12] : memref<64x64xf32, #tpu.memory_space<vmem>>, vector<64x64xf32>
    %c0_13 = arith.constant 0 : index
    %c0_14 = arith.constant 0 : index
    %7 = vector.load %arg8[%c0_13, %c0_14] : memref<128x128xf32, #tpu.memory_space<vmem>>, vector<128x128xf32>
    %c0_15 = arith.constant 0 : index
    %c0_16 = arith.constant 0 : index
    %8 = vector.load %arg9[%c0_15, %c0_16] : memref<64x128xf32, #tpu.memory_space<vmem>>, vector<64x128xf32>
    %c0_17 = arith.constant 0 : index
    %c0_18 = arith.constant 0 : index
    %9 = vector.load %arg10[%c0_17, %c0_18] : memref<128x32xf32, #tpu.memory_space<vmem>>, vector<128x32xf32>
    %c0_19 = arith.constant 0 : index
    %c0_20 = arith.constant 0 : index
    %10 = vector.load %arg11[%c0_19, %c0_20] : memref<1x32xf32, #tpu.memory_space<vmem>>, vector<1x32xf32>
    %c0_21 = arith.constant 0 : index
    %c0_22 = arith.constant 0 : index
    %11 = vector.load %arg12[%c0_21, %c0_22] : memref<1x32xf32, #tpu.memory_space<vmem>>, vector<1x32xf32>
    %c0_23 = arith.constant 0 : index
    %c0_24 = arith.constant 0 : index
    %12 = vector.load %arg13[%c0_23, %c0_24] : memref<1x32xf32, #tpu.memory_space<vmem>>, vector<1x32xf32>
    %c0_25 = arith.constant 0 : index
    %c0_26 = arith.constant 0 : index
    %13 = vector.load %arg14[%c0_25, %c0_26] : memref<32x1024xf32, #tpu.memory_space<vmem>>, vector<32x1024xf32>
    %c0_27 = arith.constant 0 : index
    %c0_28 = arith.constant 0 : index
    %14 = vector.load %arg15[%c0_27, %c0_28] : memref<1x1024xf32, #tpu.memory_space<vmem>>, vector<1x1024xf32>
    %c0_29 = arith.constant 0 : index
    %c0_30 = arith.constant 0 : index
    %15 = vector.load %arg16[%c0_29, %c0_30] : memref<1024x32xf32, #tpu.memory_space<vmem>>, vector<1024x32xf32>
    %c0_31 = arith.constant 0 : index
    %c0_32 = arith.constant 0 : index
    %16 = vector.load %arg17[%c0_31, %c0_32] : memref<1x32xf32, #tpu.memory_space<vmem>>, vector<1x32xf32>
    %c0_33 = arith.constant 0 : index
    %c0_34 = arith.constant 0 : index
    %17 = vector.load %arg18[%c0_33, %c0_34] : memref<1x32xf32, #tpu.memory_space<vmem>>, vector<1x32xf32>
    %c0_35 = arith.constant 0 : index
    %c0_36 = arith.constant 0 : index
    %18 = vector.load %arg19[%c0_35, %c0_36] : memref<1x32xf32, #tpu.memory_space<vmem>>, vector<1x32xf32>
    %19 = tpu.concatenate %0, %0, %0, %0 in 0 : vector<16x32xf32>, vector<16x32xf32>, vector<16x32xf32>, vector<16x32xf32> -> vector<64x32xf32>
    %cst = arith.constant dense<0.000000e+00> : vector<64x128xf32>
    %20 = tpu.matmul %19, %1, %cst {dimension_numbers = #tpu.dot_dimension_numbers<[1], [0], [0], [1], [0, 0, 1, 1], [], []>} : vector<64x32xf32>, vector<32x128xf32>, vector<64x128xf32> -> vector<64x128xf32>
    %21 = arith.mulf %20, %2 : vector<64x128xf32>
    %cst_37 = arith.constant dense<0.000000e+00> : vector<64x128xf32>
    %22 = tpu.matmul %21, %3, %cst_37 {dimension_numbers = #tpu.dot_dimension_numbers<[1], [0], [0], [1], [0, 0, 1, 1], [], []>} : vector<64x128xf32>, vector<128x128xf32>, vector<64x128xf32> -> vector<64x128xf32>
    %23 = arith.addf %22, %5 : vector<64x128xf32>
    %cst_38 = arith.constant dense<0.000000e+00> : vector<64x64xf32>
    %24 = tpu.matmul %23, %21, %cst_38 {dimension_numbers = #tpu.dot_dimension_numbers<[1], [1], [0], [0], [0, 0, 1, 0], [], []>} : vector<64x128xf32>, vector<64x128xf32>, vector<64x64xf32> -> vector<64x64xf32>
    %cst_39 = arith.constant dense<0.000000e+00> : vector<64x64xf32>
    %25 = tpu.matmul %21, %4, %cst_39 {dimension_numbers = #tpu.dot_dimension_numbers<[1], [0], [0], [1], [0, 0, 1, 1], [], []>} : vector<64x128xf32>, vector<128x64xf32>, vector<64x64xf32> -> vector<64x64xf32>
    %26 = arith.addf %24, %25 : vector<64x64xf32>
    %27 = arith.addf %26, %6 : vector<64x64xf32>
    %cst_40 = arith.constant dense<0xFF800000> : vector<64xf32>
    %28 = vector.multi_reduction <maximumf>, %27, %cst_40 [1] : vector<64x64xf32> to vector<64xf32>
    %29 = vector.shape_cast %28 : vector<64xf32> to vector<64x1xf32>
    %30 = vector.broadcast %29 : vector<64x1xf32> to vector<64x64xf32>
    %31 = arith.subf %27, %30 : vector<64x64xf32>
    %32 = math.exp %31 : vector<64x64xf32>
    %cst_41 = arith.constant dense<0.000000e+00> : vector<64xf32>
    %33 = vector.multi_reduction <add>, %32, %cst_41 [1] : vector<64x64xf32> to vector<64xf32>
    %34 = vector.shape_cast %33 : vector<64xf32> to vector<64x1xf32>
    %35 = tpu.reciprocal %34 {approx = true} : vector<64x1xf32> -> vector<64x1xf32>
    %36 = vector.broadcast %35 : vector<64x1xf32> to vector<64x64xf32>
    %37 = arith.mulf %32, %36 : vector<64x64xf32>
    %cst_42 = arith.constant dense<0.000000e+00> : vector<64x128xf32>
    %38 = tpu.matmul %21, %7, %cst_42 {dimension_numbers = #tpu.dot_dimension_numbers<[1], [0], [0], [1], [0, 0, 1, 1], [], []>} : vector<64x128xf32>, vector<128x128xf32>, vector<64x128xf32> -> vector<64x128xf32>
    %39 = arith.addf %38, %8 : vector<64x128xf32>
    %cst_43 = arith.constant dense<0.000000e+00> : vector<64x128xf32>
    %40 = tpu.matmul %37, %39, %cst_43 {dimension_numbers = #tpu.dot_dimension_numbers<[1], [0], [0], [1], [0, 0, 1, 1], [], []>} : vector<64x64xf32>, vector<64x128xf32>, vector<64x128xf32> -> vector<64x128xf32>
    %41 = arith.mulf %40, %2 : vector<64x128xf32>
    %cst_44 = arith.constant dense<0.000000e+00> : vector<64x32xf32>
    %42 = tpu.matmul %41, %9, %cst_44 {dimension_numbers = #tpu.dot_dimension_numbers<[1], [0], [0], [1], [0, 0, 1, 1], [], []>} : vector<64x128xf32>, vector<128x32xf32>, vector<64x32xf32> -> vector<64x32xf32>
    %43 = vector.extract_strided_slice %42 {offsets = [0, 0], sizes = [16, 32], strides = [1, 1]} : vector<64x32xf32> to vector<16x32xf32>
    %44 = vector.broadcast %10 : vector<1x32xf32> to vector<16x32xf32>
    %45 = arith.addf %44, %43 : vector<16x32xf32>
    %46 = vector.extract_strided_slice %42 {offsets = [16, 0], sizes = [16, 32], strides = [1, 1]} : vector<64x32xf32> to vector<16x32xf32>
    %47 = arith.addf %45, %46 : vector<16x32xf32>
    %48 = vector.extract_strided_slice %42 {offsets = [32, 0], sizes = [16, 32], strides = [1, 1]} : vector<64x32xf32> to vector<16x32xf32>
    %49 = arith.addf %47, %48 : vector<16x32xf32>
    %50 = vector.extract_strided_slice %42 {offsets = [48, 0], sizes = [16, 32], strides = [1, 1]} : vector<64x32xf32> to vector<16x32xf32>
    %51 = arith.addf %49, %50 : vector<16x32xf32>
    %52 = arith.addf %51, %0 : vector<16x32xf32>
    %cst_45 = arith.constant dense<0.000000e+00> : vector<16xf32>
    %53 = vector.multi_reduction <add>, %52, %cst_45 [1] : vector<16x32xf32> to vector<16xf32>
    %54 = vector.shape_cast %53 : vector<16xf32> to vector<16x1xf32>
    %cst_46 = arith.constant 3.200000e+01 : f32
    %55 = vector.broadcast %cst_46 : f32 to vector<16x1xf32>
    %56 = arith.divf %54, %55 : vector<16x1xf32>
    %57 = vector.broadcast %56 : vector<16x1xf32> to vector<16x32xf32>
    %58 = arith.subf %52, %57 : vector<16x32xf32>
    %59 = arith.mulf %58, %58 : vector<16x32xf32>
    %cst_47 = arith.constant dense<0.000000e+00> : vector<16xf32>
    %60 = vector.multi_reduction <add>, %59, %cst_47 [1] : vector<16x32xf32> to vector<16xf32>
    %61 = vector.shape_cast %60 : vector<16xf32> to vector<16x1xf32>
    %cst_48 = arith.constant 3.200000e+01 : f32
    %62 = vector.broadcast %cst_48 : f32 to vector<16x1xf32>
    %63 = arith.divf %61, %62 : vector<16x1xf32>
    %64 = vector.broadcast %56 : vector<16x1xf32> to vector<16x32xf32>
    %65 = arith.subf %52, %64 : vector<16x32xf32>
    %cst_49 = arith.constant 9.99999974E-6 : f32
    %66 = vector.broadcast %cst_49 : f32 to vector<16x1xf32>
    %67 = arith.addf %63, %66 : vector<16x1xf32>
    %68 = math.rsqrt %67 : vector<16x1xf32>
    %69 = vector.broadcast %68 : vector<16x1xf32> to vector<16x32xf32>
    %70 = arith.mulf %65, %69 : vector<16x32xf32>
    %71 = vector.broadcast %11 : vector<1x32xf32> to vector<16x32xf32>
    %72 = arith.mulf %70, %71 : vector<16x32xf32>
    %73 = vector.broadcast %12 : vector<1x32xf32> to vector<16x32xf32>
    %74 = arith.addf %72, %73 : vector<16x32xf32>
    %cst_50 = arith.constant dense<0.000000e+00> : vector<16x1024xf32>
    %75 = tpu.matmul %74, %13, %cst_50 {dimension_numbers = #tpu.dot_dimension_numbers<[1], [0], [0], [1], [0, 0, 1, 1], [], []>} : vector<16x32xf32>, vector<32x1024xf32>, vector<16x1024xf32> -> vector<16x1024xf32>
    %76 = vector.broadcast %14 : vector<1x1024xf32> to vector<16x1024xf32>
    %77 = arith.addf %75, %76 : vector<16x1024xf32>
    %cst_51 = arith.constant 0.000000e+00 : f32
    %78 = vector.broadcast %cst_51 : f32 to vector<16x1024xf32>
    %79 = arith.maximumf %77, %78 : vector<16x1024xf32>
    %cst_52 = arith.constant dense<0.000000e+00> : vector<16x32xf32>
    %80 = tpu.matmul %79, %15, %cst_52 {dimension_numbers = #tpu.dot_dimension_numbers<[1], [0], [0], [1], [0, 0, 1, 1], [], []>} : vector<16x1024xf32>, vector<1024x32xf32>, vector<16x32xf32> -> vector<16x32xf32>
    %81 = vector.broadcast %16 : vector<1x32xf32> to vector<16x32xf32>
    %82 = arith.addf %80, %81 : vector<16x32xf32>
    %83 = arith.addf %82, %74 : vector<16x32xf32>
    %cst_53 = arith.constant dense<0.000000e+00> : vector<16xf32>
    %84 = vector.multi_reduction <add>, %83, %cst_53 [1] : vector<16x32xf32> to vector<16xf32>
    %85 = vector.shape_cast %84 : vector<16xf32> to vector<16x1xf32>
    %cst_54 = arith.constant 3.200000e+01 : f32
    %86 = vector.broadcast %cst_54 : f32 to vector<16x1xf32>
    %87 = arith.divf %85, %86 : vector<16x1xf32>
    %88 = vector.broadcast %87 : vector<16x1xf32> to vector<16x32xf32>
    %89 = arith.subf %83, %88 : vector<16x32xf32>
    %90 = arith.mulf %89, %89 : vector<16x32xf32>
    %cst_55 = arith.constant dense<0.000000e+00> : vector<16xf32>
    %91 = vector.multi_reduction <add>, %90, %cst_55 [1] : vector<16x32xf32> to vector<16xf32>
    %92 = vector.shape_cast %91 : vector<16xf32> to vector<16x1xf32>
    %cst_56 = arith.constant 3.200000e+01 : f32
    %93 = vector.broadcast %cst_56 : f32 to vector<16x1xf32>
    %94 = arith.divf %92, %93 : vector<16x1xf32>
    %95 = vector.broadcast %87 : vector<16x1xf32> to vector<16x32xf32>
    %96 = arith.subf %83, %95 : vector<16x32xf32>
    %cst_57 = arith.constant 9.99999974E-6 : f32
    %97 = vector.broadcast %cst_57 : f32 to vector<16x1xf32>
    %98 = arith.addf %94, %97 : vector<16x1xf32>
    %99 = math.rsqrt %98 : vector<16x1xf32>
    %100 = vector.broadcast %99 : vector<16x1xf32> to vector<16x32xf32>
    %101 = arith.mulf %96, %100 : vector<16x32xf32>
    %102 = vector.broadcast %17 : vector<1x32xf32> to vector<16x32xf32>
    %103 = arith.mulf %101, %102 : vector<16x32xf32>
    %104 = vector.broadcast %18 : vector<1x32xf32> to vector<16x32xf32>
    %105 = arith.addf %103, %104 : vector<16x32xf32>
    %106 = tpu.concatenate %105, %105, %105, %105 in 0 : vector<16x32xf32>, vector<16x32xf32>, vector<16x32xf32>, vector<16x32xf32> -> vector<64x32xf32>
    %cst_58 = arith.constant dense<0.000000e+00> : vector<64x128xf32>
    %107 = tpu.matmul %106, %1, %cst_58 {dimension_numbers = #tpu.dot_dimension_numbers<[1], [0], [0], [1], [0, 0, 1, 1], [], []>} : vector<64x32xf32>, vector<32x128xf32>, vector<64x128xf32> -> vector<64x128xf32>
    %108 = arith.mulf %107, %2 : vector<64x128xf32>
    %cst_59 = arith.constant dense<0.000000e+00> : vector<64x128xf32>
    %109 = tpu.matmul %108, %3, %cst_59 {dimension_numbers = #tpu.dot_dimension_numbers<[1], [0], [0], [1], [0, 0, 1, 1], [], []>} : vector<64x128xf32>, vector<128x128xf32>, vector<64x128xf32> -> vector<64x128xf32>
    %110 = arith.addf %109, %5 : vector<64x128xf32>
    %cst_60 = arith.constant dense<0.000000e+00> : vector<64x64xf32>
    %111 = tpu.matmul %110, %108, %cst_60 {dimension_numbers = #tpu.dot_dimension_numbers<[1], [1], [0], [0], [0, 0, 1, 0], [], []>} : vector<64x128xf32>, vector<64x128xf32>, vector<64x64xf32> -> vector<64x64xf32>
    %cst_61 = arith.constant dense<0.000000e+00> : vector<64x64xf32>
    %112 = tpu.matmul %108, %4, %cst_61 {dimension_numbers = #tpu.dot_dimension_numbers<[1], [0], [0], [1], [0, 0, 1, 1], [], []>} : vector<64x128xf32>, vector<128x64xf32>, vector<64x64xf32> -> vector<64x64xf32>
    %113 = arith.addf %111, %112 : vector<64x64xf32>
    %114 = arith.addf %113, %6 : vector<64x64xf32>
    %cst_62 = arith.constant dense<0xFF800000> : vector<64xf32>
    %115 = vector.multi_reduction <maximumf>, %114, %cst_62 [1] : vector<64x64xf32> to vector<64xf32>
    %116 = vector.shape_cast %115 : vector<64xf32> to vector<64x1xf32>
    %117 = vector.broadcast %116 : vector<64x1xf32> to vector<64x64xf32>
    %118 = arith.subf %114, %117 : vector<64x64xf32>
    %119 = math.exp %118 : vector<64x64xf32>
    %cst_63 = arith.constant dense<0.000000e+00> : vector<64xf32>
    %120 = vector.multi_reduction <add>, %119, %cst_63 [1] : vector<64x64xf32> to vector<64xf32>
    %121 = vector.shape_cast %120 : vector<64xf32> to vector<64x1xf32>
    %122 = tpu.reciprocal %121 {approx = true} : vector<64x1xf32> -> vector<64x1xf32>
    %123 = vector.broadcast %122 : vector<64x1xf32> to vector<64x64xf32>
    %124 = arith.mulf %119, %123 : vector<64x64xf32>
    %cst_64 = arith.constant dense<0.000000e+00> : vector<64x128xf32>
    %125 = tpu.matmul %108, %7, %cst_64 {dimension_numbers = #tpu.dot_dimension_numbers<[1], [0], [0], [1], [0, 0, 1, 1], [], []>} : vector<64x128xf32>, vector<128x128xf32>, vector<64x128xf32> -> vector<64x128xf32>
    %126 = arith.addf %125, %8 : vector<64x128xf32>
    %cst_65 = arith.constant dense<0.000000e+00> : vector<64x128xf32>
    %127 = tpu.matmul %124, %126, %cst_65 {dimension_numbers = #tpu.dot_dimension_numbers<[1], [0], [0], [1], [0, 0, 1, 1], [], []>} : vector<64x64xf32>, vector<64x128xf32>, vector<64x128xf32> -> vector<64x128xf32>
    %128 = arith.mulf %127, %2 : vector<64x128xf32>
    %cst_66 = arith.constant dense<0.000000e+00> : vector<64x32xf32>
    %129 = tpu.matmul %128, %9, %cst_66 {dimension_numbers = #tpu.dot_dimension_numbers<[1], [0], [0], [1], [0, 0, 1, 1], [], []>} : vector<64x128xf32>, vector<128x32xf32>, vector<64x32xf32> -> vector<64x32xf32>
    %130 = vector.extract_strided_slice %129 {offsets = [0, 0], sizes = [16, 32], strides = [1, 1]} : vector<64x32xf32> to vector<16x32xf32>
    %131 = vector.broadcast %10 : vector<1x32xf32> to vector<16x32xf32>
    %132 = arith.addf %131, %130 : vector<16x32xf32>
    %133 = vector.extract_strided_slice %129 {offsets = [16, 0], sizes = [16, 32], strides = [1, 1]} : vector<64x32xf32> to vector<16x32xf32>
    %134 = arith.addf %132, %133 : vector<16x32xf32>
    %135 = vector.extract_strided_slice %129 {offsets = [32, 0], sizes = [16, 32], strides = [1, 1]} : vector<64x32xf32> to vector<16x32xf32>
    %136 = arith.addf %134, %135 : vector<16x32xf32>
    %137 = vector.extract_strided_slice %129 {offsets = [48, 0], sizes = [16, 32], strides = [1, 1]} : vector<64x32xf32> to vector<16x32xf32>
    %138 = arith.addf %136, %137 : vector<16x32xf32>
    %139 = arith.addf %138, %105 : vector<16x32xf32>
    %cst_67 = arith.constant dense<0.000000e+00> : vector<16xf32>
    %140 = vector.multi_reduction <add>, %139, %cst_67 [1] : vector<16x32xf32> to vector<16xf32>
    %141 = vector.shape_cast %140 : vector<16xf32> to vector<16x1xf32>
    %cst_68 = arith.constant 3.200000e+01 : f32
    %142 = vector.broadcast %cst_68 : f32 to vector<16x1xf32>
    %143 = arith.divf %141, %142 : vector<16x1xf32>
    %144 = vector.broadcast %143 : vector<16x1xf32> to vector<16x32xf32>
    %145 = arith.subf %139, %144 : vector<16x32xf32>
    %146 = arith.mulf %145, %145 : vector<16x32xf32>
    %cst_69 = arith.constant dense<0.000000e+00> : vector<16xf32>
    %147 = vector.multi_reduction <add>, %146, %cst_69 [1] : vector<16x32xf32> to vector<16xf32>
    %148 = vector.shape_cast %147 : vector<16xf32> to vector<16x1xf32>
    %cst_70 = arith.constant 3.200000e+01 : f32
    %149 = vector.broadcast %cst_70 : f32 to vector<16x1xf32>
    %150 = arith.divf %148, %149 : vector<16x1xf32>
    %151 = vector.broadcast %143 : vector<16x1xf32> to vector<16x32xf32>
    %152 = arith.subf %139, %151 : vector<16x32xf32>
    %cst_71 = arith.constant 9.99999974E-6 : f32
    %153 = vector.broadcast %cst_71 : f32 to vector<16x1xf32>
    %154 = arith.addf %150, %153 : vector<16x1xf32>
    %155 = math.rsqrt %154 : vector<16x1xf32>
    %156 = vector.broadcast %155 : vector<16x1xf32> to vector<16x32xf32>
    %157 = arith.mulf %152, %156 : vector<16x32xf32>
    %158 = vector.broadcast %11 : vector<1x32xf32> to vector<16x32xf32>
    %159 = arith.mulf %157, %158 : vector<16x32xf32>
    %160 = vector.broadcast %12 : vector<1x32xf32> to vector<16x32xf32>
    %161 = arith.addf %159, %160 : vector<16x32xf32>
    %cst_72 = arith.constant dense<0.000000e+00> : vector<16x1024xf32>
    %162 = tpu.matmul %161, %13, %cst_72 {dimension_numbers = #tpu.dot_dimension_numbers<[1], [0], [0], [1], [0, 0, 1, 1], [], []>} : vector<16x32xf32>, vector<32x1024xf32>, vector<16x1024xf32> -> vector<16x1024xf32>
    %163 = vector.broadcast %14 : vector<1x1024xf32> to vector<16x1024xf32>
    %164 = arith.addf %162, %163 : vector<16x1024xf32>
    %cst_73 = arith.constant 0.000000e+00 : f32
    %165 = vector.broadcast %cst_73 : f32 to vector<16x1024xf32>
    %166 = arith.maximumf %164, %165 : vector<16x1024xf32>
    %cst_74 = arith.constant dense<0.000000e+00> : vector<16x32xf32>
    %167 = tpu.matmul %166, %15, %cst_74 {dimension_numbers = #tpu.dot_dimension_numbers<[1], [0], [0], [1], [0, 0, 1, 1], [], []>} : vector<16x1024xf32>, vector<1024x32xf32>, vector<16x32xf32> -> vector<16x32xf32>
    %168 = vector.broadcast %16 : vector<1x32xf32> to vector<16x32xf32>
    %169 = arith.addf %167, %168 : vector<16x32xf32>
    %170 = arith.addf %169, %161 : vector<16x32xf32>
    %cst_75 = arith.constant dense<0.000000e+00> : vector<16xf32>
    %171 = vector.multi_reduction <add>, %170, %cst_75 [1] : vector<16x32xf32> to vector<16xf32>
    %172 = vector.shape_cast %171 : vector<16xf32> to vector<16x1xf32>
    %cst_76 = arith.constant 3.200000e+01 : f32
    %173 = vector.broadcast %cst_76 : f32 to vector<16x1xf32>
    %174 = arith.divf %172, %173 : vector<16x1xf32>
    %175 = vector.broadcast %174 : vector<16x1xf32> to vector<16x32xf32>
    %176 = arith.subf %170, %175 : vector<16x32xf32>
    %177 = arith.mulf %176, %176 : vector<16x32xf32>
    %cst_77 = arith.constant dense<0.000000e+00> : vector<16xf32>
    %178 = vector.multi_reduction <add>, %177, %cst_77 [1] : vector<16x32xf32> to vector<16xf32>
    %179 = vector.shape_cast %178 : vector<16xf32> to vector<16x1xf32>
    %cst_78 = arith.constant 3.200000e+01 : f32
    %180 = vector.broadcast %cst_78 : f32 to vector<16x1xf32>
    %181 = arith.divf %179, %180 : vector<16x1xf32>
    %182 = vector.broadcast %174 : vector<16x1xf32> to vector<16x32xf32>
    %183 = arith.subf %170, %182 : vector<16x32xf32>
    %cst_79 = arith.constant 9.99999974E-6 : f32
    %184 = vector.broadcast %cst_79 : f32 to vector<16x1xf32>
    %185 = arith.addf %181, %184 : vector<16x1xf32>
    %186 = math.rsqrt %185 : vector<16x1xf32>
    %187 = vector.broadcast %186 : vector<16x1xf32> to vector<16x32xf32>
    %188 = arith.mulf %183, %187 : vector<16x32xf32>
    %189 = vector.broadcast %17 : vector<1x32xf32> to vector<16x32xf32>
    %190 = arith.mulf %188, %189 : vector<16x32xf32>
    %191 = vector.broadcast %18 : vector<1x32xf32> to vector<16x32xf32>
    %192 = arith.addf %190, %191 : vector<16x32xf32>
    %c0_80 = arith.constant 0 : index
    %c0_81 = arith.constant 0 : index
    %193 = vector.load %arg20[%c0_80, %c0_81] : memref<16x32xf32, #tpu.memory_space<vmem>>, vector<16x32xf32>
    tpu.vector_store %arg20[%c0_80, %c0_81], %192 {strides = array<i32>} : memref<16x32xf32, #tpu.memory_space<vmem>>, vector<16x32xf32>,
    return
  }
  func.func @transform_0(%arg0: i32) -> (i32, i32) {
    %c0_i32 = arith.constant 0 : i32
    %c0_i32_0 = arith.constant 0 : i32
    %c0_i32_1 = arith.constant 0 : i32
    return %c0_i32, %c0_i32_0 : i32, i32
  }
  func.func @transform_1(%arg0: i32) -> (i32, i32) {
    %c0_i32 = arith.constant 0 : i32
    %c0_i32_0 = arith.constant 0 : i32
    %c0_i32_1 = arith.constant 0 : i32
    return %c0_i32, %c0_i32_0 : i32, i32
  }
  func.func @transform_2(%arg0: i32) -> (i32, i32) {
    %c0_i32 = arith.constant 0 : i32
    %c0_i32_0 = arith.constant 0 : i32
    %c0_i32_1 = arith.constant 0 : i32
    return %c0_i32, %c0_i32_0 : i32, i32
  }
  func.func @transform_3(%arg0: i32) -> (i32, i32) {
    %c0_i32 = arith.constant 0 : i32
    %c0_i32_0 = arith.constant 0 : i32
    %c0_i32_1 = arith.constant 0 : i32
    return %c0_i32, %c0_i32_0 : i32, i32
  }
  func.func @transform_4(%arg0: i32) -> (i32, i32) {
    %c0_i32 = arith.constant 0 : i32
    %c0_i32_0 = arith.constant 0 : i32
    %c0_i32_1 = arith.constant 0 : i32
    return %c0_i32, %c0_i32_0 : i32, i32
  }
  func.func @transform_5(%arg0: i32) -> (i32, i32) {
    %c0_i32 = arith.constant 0 : i32
    %c0_i32_0 = arith.constant 0 : i32
    %c0_i32_1 = arith.constant 0 : i32
    return %c0_i32, %c0_i32_0 : i32, i32
  }
  func.func @transform_6(%arg0: i32) -> (i32, i32) {
    %c0_i32 = arith.constant 0 : i32
    %c0_i32_0 = arith.constant 0 : i32
    %c0_i32_1 = arith.constant 0 : i32
    return %c0_i32, %c0_i32_0 : i32, i32
  }
  func.func @transform_7(%arg0: i32) -> (i32, i32) {
    %c0_i32 = arith.constant 0 : i32
    %c0_i32_0 = arith.constant 0 : i32
    %c0_i32_1 = arith.constant 0 : i32
    return %c0_i32, %c0_i32_0 : i32, i32
  }
  func.func @transform_8(%arg0: i32) -> (i32, i32) {
    %c0_i32 = arith.constant 0 : i32
    %c0_i32_0 = arith.constant 0 : i32
    %c0_i32_1 = arith.constant 0 : i32
    return %c0_i32, %c0_i32_0 : i32, i32
  }
  func.func @transform_9(%arg0: i32) -> (i32, i32) {
    %c0_i32 = arith.constant 0 : i32
    %c0_i32_0 = arith.constant 0 : i32
    %c0_i32_1 = arith.constant 0 : i32
    return %c0_i32, %c0_i32_0 : i32, i32
  }
  func.func @transform_10(%arg0: i32) -> (i32, i32) {
    %c0_i32 = arith.constant 0 : i32
    %c0_i32_0 = arith.constant 0 : i32
    %c0_i32_1 = arith.constant 0 : i32
    return %c0_i32, %c0_i32_0 : i32, i32
  }
  func.func @transform_11(%arg0: i32) -> (i32, i32) {
    %c0_i32 = arith.constant 0 : i32
    %c0_i32_0 = arith.constant 0 : i32
    %c0_i32_1 = arith.constant 0 : i32
    return %c0_i32, %c0_i32_0 : i32, i32
  }
  func.func @transform_12(%arg0: i32) -> (i32, i32) {
    %c0_i32 = arith.constant 0 : i32
    %c0_i32_0 = arith.constant 0 : i32
    %c0_i32_1 = arith.constant 0 : i32
    return %c0_i32, %c0_i32_0 : i32, i32
  }
  func.func @transform_13(%arg0: i32) -> (i32, i32) {
    %c0_i32 = arith.constant 0 : i32
    %c0_i32_0 = arith.constant 0 : i32
    %c0_i32_1 = arith.constant 0 : i32
    return %c0_i32, %c0_i32_0 : i32, i32
  }
  func.func @transform_14(%arg0: i32) -> (i32, i32) {
    %c0_i32 = arith.constant 0 : i32
    %c0_i32_0 = arith.constant 0 : i32
    %c0_i32_1 = arith.constant 0 : i32
    return %c0_i32, %c0_i32_0 : i32, i32
  }
  func.func @transform_15(%arg0: i32) -> (i32, i32) {
    %c0_i32 = arith.constant 0 : i32
    %c0_i32_0 = arith.constant 0 : i32
    %c0_i32_1 = arith.constant 0 : i32
    return %c0_i32, %c0_i32_0 : i32, i32
  }
  func.func @transform_16(%arg0: i32) -> (i32, i32) {
    %c0_i32 = arith.constant 0 : i32
    %c0_i32_0 = arith.constant 0 : i32
    %c0_i32_1 = arith.constant 0 : i32
    return %c0_i32, %c0_i32_0 : i32, i32
  }
  func.func @transform_17(%arg0: i32) -> (i32, i32) {
    %c0_i32 = arith.constant 0 : i32
    %c0_i32_0 = arith.constant 0 : i32
    %c0_i32_1 = arith.constant 0 : i32
    return %c0_i32, %c0_i32_0 : i32, i32
  }
  func.func @transform_18(%arg0: i32) -> (i32, i32) {
    %c0_i32 = arith.constant 0 : i32
    %c0_i32_0 = arith.constant 0 : i32
    %c0_i32_1 = arith.constant 0 : i32
    return %c0_i32, %c0_i32_0 : i32, i32
  }
  func.func @transform_19(%arg0: i32) -> (i32, i32) {
    %c0_i32 = arith.constant 0 : i32
    %c0_i32_0 = arith.constant 0 : i32
    %c0_i32_1 = arith.constant 0 : i32
    return %c0_i32, %c0_i32_0 : i32, i32
  }
}

</mosaic_0001>

<llo_original>
// kernel: model_forward.1
$region0: #{model_forward.1}
  #allocation0 [shape = 'u32[]', space=smem, size = 0x4, offset = 0x4, fixed_abs, tag = 'smem constant byte address 0x4 - core index']
  #allocation1 [shape = 'u32[72,128]{1,0:T(1,128)}', space=vmem, size = 0x9000, scoped, tag = 'internal scratch']
  %s0 = inlined_call_operand.vmem [shape: f32[16,32], index: 0, kind: input, shape index: {}]
  %s1 = inlined_call_operand.vmem [shape: f32[32,128], index: 1, kind: input, shape index: {}]
  %s2 = inlined_call_operand.vmem [shape: f32[64,128], index: 2, kind: input, shape index: {}]
  %s3 = inlined_call_operand.vmem [shape: f32[128,128], index: 3, kind: input, shape index: {}]
  %s4 = inlined_call_operand.vmem [shape: f32[128,64], index: 4, kind: input, shape index: {}]
  %s5 = inlined_call_operand.vmem [shape: f32[64,128], index: 5, kind: input, shape index: {}]
  %s6 = inlined_call_operand.vmem [shape: f32[64,64], index: 6, kind: input, shape index: {}]
  %s7 = inlined_call_operand.vmem [shape: f32[128,128], index: 7, kind: input, shape index: {}]
  %s8 = inlined_call_operand.vmem [shape: f32[64,128], index: 8, kind: input, shape index: {}]
  %s9 = inlined_call_operand.vmem [shape: f32[128,32], index: 9, kind: input, shape index: {}]
  %s10 = inlined_call_operand.vmem [shape: f32[1,32], index: 10, kind: input, shape index: {}]
  %s11 = inlined_call_operand.vmem [shape: f32[1,32], index: 11, kind: input, shape index: {}]
  %s12 = inlined_call_operand.vmem [shape: f32[1,32], index: 12, kind: input, shape index: {}]
  %s13 = inlined_call_operand.vmem [shape: f32[32,1024], index: 13, kind: input, shape index: {}]
  %s14 = inlined_call_operand.vmem [shape: f32[1,1024], index: 14, kind: input, shape index: {}]
  %s15 = inlined_call_operand.vmem [shape: f32[1024,32], index: 15, kind: input, shape index: {}]
  %s16 = inlined_call_operand.vmem [shape: f32[1,32], index: 16, kind: input, shape index: {}]
  %s17 = inlined_call_operand.vmem [shape: f32[1,32], index: 17, kind: input, shape index: {}]
  %s18 = inlined_call_operand.vmem [shape: f32[1,32], index: 18, kind: input, shape index: {}]
  %s19 = inlined_call_operand.vmem [shape: f32[16,32], index: 19, kind: output, shape index: {}]
  %s20 = sld [smem:[#allocation0]]
  $region86: #{model_forward.1} parent=0
    _
  %s22 = ssub.s32 1, %s20
  %s23 = scalar_select 0, %s22, %s20
  // Predicated region
  $region2: #{model_forward.1} parent=0 // pred_check
    _
  $region3: #{model_forward.1} parent=0 // pred_check_branch
    %25 = sbr.rel (0) target = $region5
  $region4: #{model_forward.1} parent=0 // pred_region
    _
  $region5: #{model_forward.1} parent=0 // pred_fallthru
    _
  // Predicated region
  $region6: #{model_forward.1} parent=0 // pred_check
    _
  $region7: #{model_forward.1} parent=0 // pred_check_branch
    %27 = sbr.rel (0) target = $region9
  $region8: #{model_forward.1} parent=0 // pred_region
    _
  $region9: #{model_forward.1} parent=0 // pred_fallthru
    _
  // Predicated region
  $region10: #{model_forward.1} parent=0 // pred_check
    _
  $region11: #{model_forward.1} parent=0 // pred_check_branch
    %29 = sbr.rel (0) target = $region13
  $region12: #{model_forward.1} parent=0 // pred_region
    _
  $region13: #{model_forward.1} parent=0 // pred_fallthru
    _
  // Predicated region
  $region14: #{model_forward.1} parent=0 // pred_check
    _
  $region15: #{model_forward.1} parent=0 // pred_check_branch
    %31 = sbr.rel (0) target = $region17
  $region16: #{model_forward.1} parent=0 // pred_region
    _
  $region17: #{model_forward.1} parent=0 // pred_fallthru
    _
  // Predicated region
  $region18: #{model_forward.1} parent=0 // pred_check
    _
  $region19: #{model_forward.1} parent=0 // pred_check_branch
    %33 = sbr.rel (0) target = $region21
  $region20: #{model_forward.1} parent=0 // pred_region
    _
  $region21: #{model_forward.1} parent=0 // pred_fallthru
    _
  // Predicated region
  $region22: #{model_forward.1} parent=0 // pred_check
    _
  $region23: #{model_forward.1} parent=0 // pred_check_branch
    %35 = sbr.rel (0) target = $region25
  $region24: #{model_forward.1} parent=0 // pred_region
    _
  $region25: #{model_forward.1} parent=0 // pred_fallthru
    _
  // Predicated region
  $region26: #{model_forward.1} parent=0 // pred_check
    _
  $region27: #{model_forward.1} parent=0 // pred_check_branch
    %37 = sbr.rel (0) target = $region29
  $region28: #{model_forward.1} parent=0 // pred_region
    _
  $region29: #{model_forward.1} parent=0 // pred_fallthru
    _
  // Predicated region
  $region30: #{model_forward.1} parent=0 // pred_check
    _
  $region31: #{model_forward.1} parent=0 // pred_check_branch
    %39 = sbr.rel (0) target = $region33
  $region32: #{model_forward.1} parent=0 // pred_region
    _
  $region33: #{model_forward.1} parent=0 // pred_fallthru
    _
  // Predicated region
  $region34: #{model_forward.1} parent=0 // pred_check
    _
  $region35: #{model_forward.1} parent=0 // pred_check_branch
    %41 = sbr.rel (0) target = $region37
  $region36: #{model_forward.1} parent=0 // pred_region
    _
  $region37: #{model_forward.1} parent=0 // pred_fallthru
    _
  // Predicated region
  $region38: #{model_forward.1} parent=0 // pred_check
    _
  $region39: #{model_forward.1} parent=0 // pred_check_branch
    %43 = sbr.rel (0) target = $region41
  $region40: #{model_forward.1} parent=0 // pred_region
    _
  $region41: #{model_forward.1} parent=0 // pred_fallthru
    _
  // Predicated region
  $region42: #{model_forward.1} parent=0 // pred_check
    _
  $region43: #{model_forward.1} parent=0 // pred_check_branch
    %45 = sbr.rel (0) target = $region45
  $region44: #{model_forward.1} parent=0 // pred_region
    _
  $region45: #{model_forward.1} parent=0 // pred_fallthru
    _
  // Predicated region
  $region46: #{model_forward.1} parent=0 // pred_check
    _
  $region47: #{model_forward.1} parent=0 // pred_check_branch
    %47 = sbr.rel (0) target = $region49
  $region48: #{model_forward.1} parent=0 // pred_region
    _
  $region49: #{model_forward.1} parent=0 // pred_fallthru
    _
  // Predicated region
  $region50: #{model_forward.1} parent=0 // pred_check
    _
  $region51: #{model_forward.1} parent=0 // pred_check_branch
    %49 = sbr.rel (0) target = $region53
  $region52: #{model_forward.1} parent=0 // pred_region
    _
  $region53: #{model_forward.1} parent=0 // pred_fallthru
    _
  // Predicated region
  $region54: #{model_forward.1} parent=0 // pred_check
    _
  $region55: #{model_forward.1} parent=0 // pred_check_branch
    %51 = sbr.rel (0) target = $region57
  $region56: #{model_forward.1} parent=0 // pred_region
    _
  $region57: #{model_forward.1} parent=0 // pred_fallthru
    _
  // Predicated region
  $region58: #{model_forward.1} parent=0 // pred_check
    _
  $region59: #{model_forward.1} parent=0 // pred_check_branch
    %53 = sbr.rel (0) target = $region61
  $region60: #{model_forward.1} parent=0 // pred_region
    _
  $region61: #{model_forward.1} parent=0 // pred_fallthru
    _
  // Predicated region
  $region62: #{model_forward.1} parent=0 // pred_check
    _
  $region63: #{model_forward.1} parent=0 // pred_check_branch
    %55 = sbr.rel (0) target = $region65
  $region64: #{model_forward.1} parent=0 // pred_region
    _
  $region65: #{model_forward.1} parent=0 // pred_fallthru
    _
  // Predicated region
  $region66: #{model_forward.1} parent=0 // pred_check
    _
  $region67: #{model_forward.1} parent=0 // pred_check_branch
    %57 = sbr.rel (0) target = $region69
  $region68: #{model_forward.1} parent=0 // pred_region
    _
  $region69: #{model_forward.1} parent=0 // pred_fallthru
    _
  // Predicated region
  $region70: #{model_forward.1} parent=0 // pred_check
    _
  $region71: #{model_forward.1} parent=0 // pred_check_branch
    %59 = sbr.rel (0) target = $region73
  $region72: #{model_forward.1} parent=0 // pred_region
    _
  $region73: #{model_forward.1} parent=0 // pred_fallthru
    _
  // Predicated region
  $region74: #{model_forward.1} parent=0 // pred_check
    _
  $region75: #{model_forward.1} parent=0 // pred_check_branch
    %61 = sbr.rel (0) target = $region77
  $region76: #{model_forward.1} parent=0 // pred_region
    _
  $region77: #{model_forward.1} parent=0 // pred_fallthru
    _
  %v62 = vld [vmem:[%s0] sm:$0xff]
  %v63 = vld [vmem:[%s0 + $0x8] sm:$0xff]
  %v64 = vld [vmem:[%s1] sm:$0xff]
  %v65 = vld [vmem:[%s1 + $0x8] sm:$0xff]
  %v66 = vld [vmem:[%s1 + $0x10] sm:$0xff]
  %v67 = vld [vmem:[%s1 + $0x18] sm:$0xff]
  %v68 = vld [vmem:[%s2] sm:$0xff]
  %v69 = vld [vmem:[%s2 + $0x8] sm:$0xff]
  %v70 = vld [vmem:[%s2 + $0x10] sm:$0xff]
  %v71 = vld [vmem:[%s2 + $0x18] sm:$0xff]
  %v72 = vld [vmem:[%s2 + $0x20] sm:$0xff]
  %v73 = vld [vmem:[%s2 + $0x28] sm:$0xff]
  %v74 = vld [vmem:[%s2 + $0x30] sm:$0xff]
  %v75 = vld [vmem:[%s2 + $0x38] sm:$0xff]
  %v76 = vld [vmem:[%s3] sm:$0xff]
  %v77 = vld [vmem:[%s3 + $0x8] sm:$0xff]
  %v78 = vld [vmem:[%s3 + $0x10] sm:$0xff]
  %v79 = vld [vmem:[%s3 + $0x18] sm:$0xff]
  %v80 = vld [vmem:[%s3 + $0x20] sm:$0xff]
  %v81 = vld [vmem:[%s3 + $0x28] sm:$0xff]
  %v82 = vld [vmem:[%s3 + $0x30] sm:$0xff]
  %v83 = vld [vmem:[%s3 + $0x38] sm:$0xff]
  %v84 = vld [vmem:[%s3 + $0x40] sm:$0xff]
  %v85 = vld [vmem:[%s3 + $0x48] sm:$0xff]
  %v86 = vld [vmem:[%s3 + $0x50] sm:$0xff]
  %v87 = vld [vmem:[%s3 + $0x58] sm:$0xff]
  %v88 = vld [vmem:[%s3 + $0x60] sm:$0xff]
  %v89 = vld [vmem:[%s3 + $0x68] sm:$0xff]
  %v90 = vld [vmem:[%s3 + $0x70] sm:$0xff]
  %v91 = vld [vmem:[%s3 + $0x78] sm:$0xff]
  %v92 = vld [vmem:[%s4] sm:$0xff]
  %v93 = vld [vmem:[%s4 + $0x8] sm:$0xff]
  %v94 = vld [vmem:[%s4 + $0x10] sm:$0xff]
  %v95 = vld [vmem:[%s4 + $0x18] sm:$0xff]
  %v96 = vld [vmem:[%s4 + $0x20] sm:$0xff]
  %v97 = vld [vmem:[%s4 + $0x28] sm:$0xff]
  %v98 = vld [vmem:[%s4 + $0x30] sm:$0xff]
  %v99 = vld [vmem:[%s4 + $0x38] sm:$0xff]
  %v100 = vld [vmem:[%s4 + $0x40] sm:$0xff]
  %v101 = vld [vmem:[%s4 + $0x48] sm:$0xff]
  %v102 = vld [vmem:[%s4 + $0x50] sm:$0xff]
  %v103 = vld [vmem:[%s4 + $0x58] sm:$0xff]
  %v104 = vld [vmem:[%s4 + $0x60] sm:$0xff]
  %v105 = vld [vmem:[%s4 + $0x68] sm:$0xff]
  %v106 = vld [vmem:[%s4 + $0x70] sm:$0xff]
  %v107 = vld [vmem:[%s4 + $0x78] sm:$0xff]
  %v108 = vld [vmem:[%s5] sm:$0xff]
  %v109 = vld [vmem:[%s5 + $0x8] sm:$0xff]
  %v110 = vld [vmem:[%s5 + $0x10] sm:$0xff]
  %v111 = vld [vmem:[%s5 + $0x18] sm:$0xff]
  %v112 = vld [vmem:[%s5 + $0x20] sm:$0xff]
  %v113 = vld [vmem:[%s5 + $0x28] sm:$0xff]
  %v114 = vld [vmem:[%s5 + $0x30] sm:$0xff]
  %v115 = vld [vmem:[%s5 + $0x38] sm:$0xff]
  %v116 = vld [vmem:[%s6] sm:$0xff]
  %v117 = vld [vmem:[%s6 + $0x8] sm:$0xff]
  %v118 = vld [vmem:[%s6 + $0x10] sm:$0xff]
  %v119 = vld [vmem:[%s6 + $0x18] sm:$0xff]
  %v120 = vld [vmem:[%s6 + $0x20] sm:$0xff]
  %v121 = vld [vmem:[%s6 + $0x28] sm:$0xff]
  %v122 = vld [vmem:[%s6 + $0x30] sm:$0xff]
  %v123 = vld [vmem:[%s6 + $0x38] sm:$0xff]
  %v124 = vld [vmem:[%s7] sm:$0xff]
  %v125 = vld [vmem:[%s7 + $0x8] sm:$0xff]
  %v126 = vld [vmem:[%s7 + $0x10] sm:$0xff]
  %v127 = vld [vmem:[%s7 + $0x18] sm:$0xff]
  %v128 = vld [vmem:[%s7 + $0x20] sm:$0xff]
  %v129 = vld [vmem:[%s7 + $0x28] sm:$0xff]
  %v130 = vld [vmem:[%s7 + $0x30] sm:$0xff]
  %v131 = vld [vmem:[%s7 + $0x38] sm:$0xff]
  %v132 = vld [vmem:[%s7 + $0x40] sm:$0xff]
  %v133 = vld [vmem:[%s7 + $0x48] sm:$0xff]
  %v134 = vld [vmem:[%s7 + $0x50] sm:$0xff]
  %v135 = vld [vmem:[%s7 + $0x58] sm:$0xff]
  %v136 = vld [vmem:[%s7 + $0x60] sm:$0xff]
  %v137 = vld [vmem:[%s7 + $0x68] sm:$0xff]
  %v138 = vld [vmem:[%s7 + $0x70] sm:$0xff]
  %v139 = vld [vmem:[%s7 + $0x78] sm:$0xff]
  %v140 = vld [vmem:[%s8] sm:$0xff]
  %v141 = vld [vmem:[%s8 + $0x8] sm:$0xff]
  %v142 = vld [vmem:[%s8 + $0x10] sm:$0xff]
  %v143 = vld [vmem:[%s8 + $0x18] sm:$0xff]
  %v144 = vld [vmem:[%s8 + $0x20] sm:$0xff]
  %v145 = vld [vmem:[%s8 + $0x28] sm:$0xff]
  %v146 = vld [vmem:[%s8 + $0x30] sm:$0xff]
  %v147 = vld [vmem:[%s8 + $0x38] sm:$0xff]
  %v148 = vld [vmem:[%s9] sm:$0xff]
  %v149 = vld [vmem:[%s9 + $0x8] sm:$0xff]
  %v150 = vld [vmem:[%s9 + $0x10] sm:$0xff]
  %v151 = vld [vmem:[%s9 + $0x18] sm:$0xff]
  %v152 = vld [vmem:[%s9 + $0x20] sm:$0xff]
  %v153 = vld [vmem:[%s9 + $0x28] sm:$0xff]
  %v154 = vld [vmem:[%s9 + $0x30] sm:$0xff]
  %v155 = vld [vmem:[%s9 + $0x38] sm:$0xff]
  %v156 = vld [vmem:[%s9 + $0x40] sm:$0xff]
  %v157 = vld [vmem:[%s9 + $0x48] sm:$0xff]
  %v158 = vld [vmem:[%s9 + $0x50] sm:$0xff]
  %v159 = vld [vmem:[%s9 + $0x58] sm:$0xff]
  %v160 = vld [vmem:[%s9 + $0x60] sm:$0xff]
  %v161 = vld [vmem:[%s9 + $0x68] sm:$0xff]
  %v162 = vld [vmem:[%s9 + $0x70] sm:$0xff]
  %v163 = vld [vmem:[%s9 + $0x78] sm:$0xff]
  %v164 = vld [vmem:[%s10] sm:$0x1]
  %v165 = vld [vmem:[%s11] sm:$0x1]
  %v166 = vld [vmem:[%s12] sm:$0x1]
  %v167 = vld [vmem:[%s13] sm:$0xff]
  %v168 = vld [vmem:[%s13 + $0x8] sm:$0xff]
  %v169 = vld [vmem:[%s13 + $0x10] sm:$0xff]
  %v170 = vld [vmem:[%s13 + $0x18] sm:$0xff]
  %v171 = vld [vmem:[%s13 + $0x20] sm:$0xff]
  %v172 = vld [vmem:[%s13 + $0x28] sm:$0xff]
  %v173 = vld [vmem:[%s13 + $0x30] sm:$0xff]
  %v174 = vld [vmem:[%s13 + $0x38] sm:$0xff]
  %v175 = vld [vmem:[%s13 + $0x40] sm:$0xff]
  %v176 = vld [vmem:[%s13 + $0x48] sm:$0xff]
  %v177 = vld [vmem:[%s13 + $0x50] sm:$0xff]
  %v178 = vld [vmem:[%s13 + $0x58] sm:$0xff]
  %v179 = vld [vmem:[%s13 + $0x60] sm:$0xff]
  %v180 = vld [vmem:[%s13 + $0x68] sm:$0xff]
  %v181 = vld [vmem:[%s13 + $0x70] sm:$0xff]
  %v182 = vld [vmem:[%s13 + $0x78] sm:$0xff]
  %v183 = vld [vmem:[%s13 + $0x80] sm:$0xff]
  %v184 = vld [vmem:[%s13 + $0x88] sm:$0xff]
  %v185 = vld [vmem:[%s13 + $0x90] sm:$0xff]
  %v186 = vld [vmem:[%s13 + $0x98] sm:$0xff]
  %v187 = vld [vmem:[%s13 + $0xa0] sm:$0xff]
  %v188 = vld [vmem:[%s13 + $0xa8] sm:$0xff]
  %v189 = vld [vmem:[%s13 + $0xb0] sm:$0xff]
  %v190 = vld [vmem:[%s13 + $0xb8] sm:$0xff]
  %v191 = vld [vmem:[%s13 + $0xc0] sm:$0xff]
  %v192 = vld [vmem:[%s13 + $0xc8] sm:$0xff]
  %v193 = vld [vmem:[%s13 + $0xd0] sm:$0xff]
  %v194 = vld [vmem:[%s13 + $0xd8] sm:$0xff]
  %v195 = vld [vmem:[%s13 + $0xe0] sm:$0xff]
  %v196 = vld [vmem:[%s13 + $0xe8] sm:$0xff]
  %v197 = vld [vmem:[%s13 + $0xf0] sm:$0xff]
  %v198 = vld [vmem:[%s13 + $0xf8] sm:$0xff]
  %v199 = vld [vmem:[%s14] sm:$0xff]
  %v200 = vld [vmem:[%s15] sm:$0xff]
  %v201 = vld [vmem:[%s15 + $0x8] sm:$0xff]
  %v202 = vld [vmem:[%s15 + $0x10] sm:$0xff]
  %v203 = vld [vmem:[%s15 + $0x18] sm:$0xff]
  %v204 = vld [vmem:[%s15 + $0x20] sm:$0xff]
  %v205 = vld [vmem:[%s15 + $0x28] sm:$0xff]
  %v206 = vld [vmem:[%s15 + $0x30] sm:$0xff]
  %v207 = vld [vmem:[%s15 + $0x38] sm:$0xff]
  %v208 = vld [vmem:[%s15 + $0x40] sm:$0xff]
  %v209 = vld [vmem:[%s15 + $0x48] sm:$0xff]
  %v210 = vld [vmem:[%s15 + $0x50] sm:$0xff]
  %v211 = vld [vmem:[%s15 + $0x58] sm:$0xff]
  %v212 = vld [vmem:[%s15 + $0x60] sm:$0xff]
  %v213 = vld [vmem:[%s15 + $0x68] sm:$0xff]
  %v214 = vld [vmem:[%s15 + $0x70] sm:$0xff]
  %v215 = vld [vmem:[%s15 + $0x78] sm:$0xff]
  %v216 = vld [vmem:[%s15 + $0x80] sm:$0xff]
  %v217 = vld [vmem:[%s15 + $0x88] sm:$0xff]
  %v218 = vld [vmem:[%s15 + $0x90] sm:$0xff]
  %v219 = vld [vmem:[%s15 + $0x98] sm:$0xff]
  %v220 = vld [vmem:[%s15 + $0xa0] sm:$0xff]
  %v221 = vld [vmem:[%s15 + $0xa8] sm:$0xff]
  %v222 = vld [vmem:[%s15 + $0xb0] sm:$0xff]
  %v223 = vld [vmem:[%s15 + $0xb8] sm:$0xff]
  %v224 = vld [vmem:[%s15 + $0xc0] sm:$0xff]
  %v225 = vld [vmem:[%s15 + $0xc8] sm:$0xff]
  %v226 = vld [vmem:[%s15 + $0xd0] sm:$0xff]
  %v227 = vld [vmem:[%s15 + $0xd8] sm:$0xff]
  %v228 = vld [vmem:[%s15 + $0xe0] sm:$0xff]
  %v229 = vld [vmem:[%s15 + $0xe8] sm:$0xff]
  %v230 = vld [vmem:[%s15 + $0xf0] sm:$0xff]
  %v231 = vld [vmem:[%s15 + $0xf8] sm:$0xff]
  %v232 = vld [vmem:[%s15 + $0x100] sm:$0xff]
  %v233 = vld [vmem:[%s15 + $0x108] sm:$0xff]
  %v234 = vld [vmem:[%s15 + $0x110] sm:$0xff]
  %v235 = vld [vmem:[%s15 + $0x118] sm:$0xff]
  %v236 = vld [vmem:[%s15 + $0x120] sm:$0xff]
  %v237 = vld [vmem:[%s15 + $0x128] sm:$0xff]
  %v238 = vld [vmem:[%s15 + $0x130] sm:$0xff]
  %v239 = vld [vmem:[%s15 + $0x138] sm:$0xff]
  %v240 = vld [vmem:[%s15 + $0x140] sm:$0xff]
  %v241 = vld [vmem:[%s15 + $0x148] sm:$0xff]
  %v242 = vld [vmem:[%s15 + $0x150] sm:$0xff]
  %v243 = vld [vmem:[%s15 + $0x158] sm:$0xff]
  %v244 = vld [vmem:[%s15 + $0x160] sm:$0xff]
  %v245 = vld [vmem:[%s15 + $0x168] sm:$0xff]
  %v246 = vld [vmem:[%s15 + $0x170] sm:$0xff]
  %v247 = vld [vmem:[%s15 + $0x178] sm:$0xff]
  %v248 = vld [vmem:[%s15 + $0x180] sm:$0xff]
  %v249 = vld [vmem:[%s15 + $0x188] sm:$0xff]
  %v250 = vld [vmem:[%s15 + $0x190] sm:$0xff]
  %v251 = vld [vmem:[%s15 + $0x198] sm:$0xff]
  %v252 = vld [vmem:[%s15 + $0x1a0] sm:$0xff]
  %v253 = vld [vmem:[%s15 + $0x1a8] sm:$0xff]
  %v254 = vld [vmem:[%s15 + $0x1b0] sm:$0xff]
  %v255 = vld [vmem:[%s15 + $0x1b8] sm:$0xff]
  %v256 = vld [vmem:[%s15 + $0x1c0] sm:$0xff]
  %v257 = vld [vmem:[%s15 + $0x1c8] sm:$0xff]
  %v258 = vld [vmem:[%s15 + $0x1d0] sm:$0xff]
  %v259 = vld [vmem:[%s15 + $0x1d8] sm:$0xff]
  %v260 = vld [vmem:[%s15 + $0x1e0] sm:$0xff]
  %v261 = vld [vmem:[%s15 + $0x1e8] sm:$0xff]
  %v262 = vld [vmem:[%s15 + $0x1f0] sm:$0xff]
  %v263 = vld [vmem:[%s15 + $0x1f8] sm:$0xff]
  %v264 = vld [vmem:[%s15 + $0x200] sm:$0xff]
  %v265 = vld [vmem:[%s15 + $0x208] sm:$0xff]
  %v266 = vld [vmem:[%s15 + $0x210] sm:$0xff]
  %v267 = vld [vmem:[%s15 + $0x218] sm:$0xff]
  %v268 = vld [vmem:[%s15 + $0x220] sm:$0xff]
  %v269 = vld [vmem:[%s15 + $0x228] sm:$0xff]
  %v270 = vld [vmem:[%s15 + $0x230] sm:$0xff]
  %v271 = vld [vmem:[%s15 + $0x238] sm:$0xff]
  %v272 = vld [vmem:[%s15 + $0x240] sm:$0xff]
  %v273 = vld [vmem:[%s15 + $0x248] sm:$0xff]
  %v274 = vld [vmem:[%s15 + $0x250] sm:$0xff]
  %v275 = vld [vmem:[%s15 + $0x258] sm:$0xff]
  %v276 = vld [vmem:[%s15 + $0x260] sm:$0xff]
  %v277 = vld [vmem:[%s15 + $0x268] sm:$0xff]
  %v278 = vld [vmem:[%s15 + $0x270] sm:$0xff]
  %v279 = vld [vmem:[%s15 + $0x278] sm:$0xff]
  %v280 = vld [vmem:[%s15 + $0x280] sm:$0xff]
  %v281 = vld [vmem:[%s15 + $0x288] sm:$0xff]
  %v282 = vld [vmem:[%s15 + $0x290] sm:$0xff]
  %v283 = vld [vmem:[%s15 + $0x298] sm:$0xff]
  %v284 = vld [vmem:[%s15 + $0x2a0] sm:$0xff]
  %v285 = vld [vmem:[%s15 + $0x2a8] sm:$0xff]
  %v286 = vld [vmem:[%s15 + $0x2b0] sm:$0xff]
  %v287 = vld [vmem:[%s15 + $0x2b8] sm:$0xff]
  %v288 = vld [vmem:[%s15 + $0x2c0] sm:$0xff]
  %v289 = vld [vmem:[%s15 + $0x2c8] sm:$0xff]
  %v290 = vld [vmem:[%s15 + $0x2d0] sm:$0xff]
  %v291 = vld [vmem:[%s15 + $0x2d8] sm:$0xff]
  %v292 = vld [vmem:[%s15 + $0x2e0] sm:$0xff]
  %v293 = vld [vmem:[%s15 + $0x2e8] sm:$0xff]
  %v294 = vld [vmem:[%s15 + $0x2f0] sm:$0xff]
  %v295 = vld [vmem:[%s15 + $0x2f8] sm:$0xff]
  %v296 = vld [vmem:[%s15 + $0x300] sm:$0xff]
  %v297 = vld [vmem:[%s15 + $0x308] sm:$0xff]
  %v298 = vld [vmem:[%s15 + $0x310] sm:$0xff]
  %v299 = vld [vmem:[%s15 + $0x318] sm:$0xff]
  %v300 = vld [vmem:[%s15 + $0x320] sm:$0xff]
  %v301 = vld [vmem:[%s15 + $0x328] sm:$0xff]
  %v302 = vld [vmem:[%s15 + $0x330] sm:$0xff]
  %v303 = vld [vmem:[%s15 + $0x338] sm:$0xff]
  %v304 = vld [vmem:[%s15 + $0x340] sm:$0xff]
  %v305 = vld [vmem:[%s15 + $0x348] sm:$0xff]
  %v306 = vld [vmem:[%s15 + $0x350] sm:$0xff]
  %v307 = vld [vmem:[%s15 + $0x358] sm:$0xff]
  %v308 = vld [vmem:[%s15 + $0x360] sm:$0xff]
  %v309 = vld [vmem:[%s15 + $0x368] sm:$0xff]
  %v310 = vld [vmem:[%s15 + $0x370] sm:$0xff]
  %v311 = vld [vmem:[%s15 + $0x378] sm:$0xff]
  %v312 = vld [vmem:[%s15 + $0x380] sm:$0xff]
  %v313 = vld [vmem:[%s15 + $0x388] sm:$0xff]
  %v314 = vld [vmem:[%s15 + $0x390] sm:$0xff]
  %v315 = vld [vmem:[%s15 + $0x398] sm:$0xff]
  %v316 = vld [vmem:[%s15 + $0x3a0] sm:$0xff]
  %v317 = vld [vmem:[%s15 + $0x3a8] sm:$0xff]
  %v318 = vld [vmem:[%s15 + $0x3b0] sm:$0xff]
  %v319 = vld [vmem:[%s15 + $0x3b8] sm:$0xff]
  %v320 = vld [vmem:[%s15 + $0x3c0] sm:$0xff]
  %v321 = vld [vmem:[%s15 + $0x3c8] sm:$0xff]
  %v322 = vld [vmem:[%s15 + $0x3d0] sm:$0xff]
  %v323 = vld [vmem:[%s15 + $0x3d8] sm:$0xff]
  %v324 = vld [vmem:[%s15 + $0x3e0] sm:$0xff]
  %v325 = vld [vmem:[%s15 + $0x3e8] sm:$0xff]
  %v326 = vld [vmem:[%s15 + $0x3f0] sm:$0xff]
  %v327 = vld [vmem:[%s15 + $0x3f8] sm:$0xff]
  %v328 = vld [vmem:[%s16] sm:$0x1]
  %v329 = vld [vmem:[%s17] sm:$0x1]
  %v330 = vld [vmem:[%s18] sm:$0x1]
  %vm331 = vcmask 261120
  %v333 = vsel %vm331, %v62, 0
  %v336 = vsel %vm331, %v63, 0
  %338 = vmatpush.msra.mxu0 0.0
  %339 = vmatpush.msra.mxu0 0.0
  %340 = vmatpush.msra.mxu0 0.0
  %341 = vmatpush.msra.mxu0 0.0
  %342 = vmatpush.msra.mxu0 0.0
  %343 = vmatpush.msra.mxu0 0.0
  %344 = vmatpush.msra.mxu0 0.0
  %345 = vmatpush.msra.mxu0 0.0
  %346 = vmatpush.msra.mxu0 0.0
  %347 = vmatpush.msra.mxu0 0.0
  %348 = vmatpush.msra.mxu0 0.0
  %349 = vmatpush.msra.mxu0 0.0
  %350 = vmatpush.msra.mxu0 %v67
  %351 = vmatpush.msra.mxu0 %v66
  %352 = vmatpush.msra.mxu0 %v65
  %353 = vmatpush.msra.mxu0 %v64
  %354 = vmatmul.f32.gmra.mxu0 %v333
  %v355 = vpop.f32.mrf.mxu0
  %v356 = vadd.f32 0.0, %v355
  %357 = vmatmul.f32.gmra.mxu0 %v336
  %v358 = vpop.f32.mrf.mxu0
  %v359 = vadd.f32 0.0, %v358
  %360 = vmatmul.f32.gmra.mxu0 %v333
  %v361 = vpop.f32.mrf.mxu0
  %v362 = vadd.f32 0.0, %v361
  %363 = vmatmul.f32.gmra.mxu0 %v336
  %v364 = vpop.f32.mrf.mxu0
  %v365 = vadd.f32 0.0, %v364
  %366 = vmatmul.f32.gmra.mxu0 %v333
  %v367 = vpop.f32.mrf.mxu0
  %v368 = vadd.f32 0.0, %v367
  %369 = vmatmul.f32.gmra.mxu0 %v336
  %v370 = vpop.f32.mrf.mxu0
  %v371 = vadd.f32 0.0, %v370
  %372 = vmatmul.f32.gmra.mxu0 %v333
  %v373 = vpop.f32.mrf.mxu0
  %v374 = vadd.f32 0.0, %v373
  %375 = vmatmul.f32.gmra.mxu0 %v336
  %v376 = vpop.f32.mrf.mxu0
  %v377 = vadd.f32 0.0, %v376
  %378 = vdwg.mxu0
  %v379 = vmul.f32 %v356, %v68
  %v380 = vmul.f32 %v359, %v69
  %v381 = vmul.f32 %v362, %v70
  %v382 = vmul.f32 %v365, %v71
  %v383 = vmul.f32 %v368, %v72
  %v384 = vmul.f32 %v371, %v73
  %v385 = vmul.f32 %v374, %v74
  %v386 = vmul.f32 %v377, %v75
  %387 = vmatpush.msra.mxu0 %v91
  %388 = vmatpush.msra.mxu0 %v90
  %389 = vmatpush.msra.mxu0 %v89
  %390 = vmatpush.msra.mxu0 %v88
  %391 = vmatpush.msra.mxu0 %v87
  %392 = vmatpush.msra.mxu0 %v86
  %393 = vmatpush.msra.mxu0 %v85
  %394 = vmatpush.msra.mxu0 %v84
  %395 = vmatpush.msra.mxu0 %v83
  %396 = vmatpush.msra.mxu0 %v82
  %397 = vmatpush.msra.mxu0 %v81
  %398 = vmatpush.msra.mxu0 %v80
  %399 = vmatpush.msra.mxu0 %v79
  %400 = vmatpush.msra.mxu0 %v78
  %401 = vmatpush.msra.mxu0 %v77
  %402 = vmatpush.msra.mxu0 %v76
  %403 = vmatmul.f32.gmra.mxu0 %v379
  %v404 = vpop.f32.mrf.mxu0
  %v405 = vadd.f32 %v108, %v404
  %406 = vmatmul.f32.gmra.mxu0 %v380
  %v407 = vpop.f32.mrf.mxu0
  %v408 = vadd.f32 %v109, %v407
  %409 = vmatmul.f32.gmra.mxu0 %v381
  %v410 = vpop.f32.mrf.mxu0
  %v411 = vadd.f32 %v110, %v410
  %412 = vmatmul.f32.gmra.mxu0 %v382
  %v413 = vpop.f32.mrf.mxu0
  %v414 = vadd.f32 %v111, %v413
  %415 = vmatmul.f32.gmra.mxu0 %v383
  %v416 = vpop.f32.mrf.mxu0
  %v417 = vadd.f32 %v112, %v416
  %418 = vmatmul.f32.gmra.mxu0 %v384
  %v419 = vpop.f32.mrf.mxu0
  %v420 = vadd.f32 %v113, %v419
  %421 = vmatmul.f32.gmra.mxu0 %v385
  %v422 = vpop.f32.mrf.mxu0
  %v423 = vadd.f32 %v114, %v422
  %424 = vmatmul.f32.gmra.mxu0 %v386
  %v425 = vpop.f32.mrf.mxu0
  %v426 = vadd.f32 %v115, %v425
  %427 = vdwg.mxu0
  %428 = vmatpush.msra.mxu0 %v107
  %429 = vmatpush.msra.mxu0 %v106
  %430 = vmatpush.msra.mxu0 %v105
  %431 = vmatpush.msra.mxu0 %v104
  %432 = vmatpush.msra.mxu0 %v103
  %433 = vmatpush.msra.mxu0 %v102
  %434 = vmatpush.msra.mxu0 %v101
  %435 = vmatpush.msra.mxu0 %v100
  %436 = vmatpush.msra.mxu0 %v99
  %437 = vmatpush.msra.mxu0 %v98
  %438 = vmatpush.msra.mxu0 %v97
  %439 = vmatpush.msra.mxu0 %v96
  %440 = vmatpush.msra.mxu0 %v95
  %441 = vmatpush.msra.mxu0 %v94
  %442 = vmatpush.msra.mxu0 %v93
  %443 = vmatpush.msra.mxu0 %v92
  %444 = vmatmul.f32.gmra.mxu0 %v379
  %v445 = vpop.f32.mrf.mxu0
  %v446 = vadd.f32 0.0, %v445
  %447 = vmatmul.f32.gmra.mxu0 %v380
  %v448 = vpop.f32.mrf.mxu0
  %v449 = vadd.f32 0.0, %v448
  %450 = vmatmul.f32.gmra.mxu0 %v381
  %v451 = vpop.f32.mrf.mxu0
  %v452 = vadd.f32 0.0, %v451
  %453 = vmatmul.f32.gmra.mxu0 %v382
  %v454 = vpop.f32.mrf.mxu0
  %v455 = vadd.f32 0.0, %v454
  %456 = vmatmul.f32.gmra.mxu0 %v383
  %v457 = vpop.f32.mrf.mxu0
  %v458 = vadd.f32 0.0, %v457
  %459 = vmatmul.f32.gmra.mxu0 %v384
  %v460 = vpop.f32.mrf.mxu0
  %v461 = vadd.f32 0.0, %v460
  %462 = vmatmul.f32.gmra.mxu0 %v385
  %v463 = vpop.f32.mrf.mxu0
  %v464 = vadd.f32 0.0, %v463
  %465 = vmatmul.f32.gmra.mxu0 %v386
  %v466 = vpop.f32.mrf.mxu0
  %v467 = vadd.f32 0.0, %v466
  %468 = vdwg.mxu0
  %469 = vmatpush.xpose.msra.mxu0 0.0
  %470 = vmatpush.xpose.msra.mxu0 0.0
  %471 = vmatpush.xpose.msra.mxu0 0.0
  %472 = vmatpush.xpose.msra.mxu0 0.0
  %473 = vmatpush.xpose.msra.mxu0 0.0
  %474 = vmatpush.xpose.msra.mxu0 0.0
  %475 = vmatpush.xpose.msra.mxu0 0.0
  %476 = vmatpush.xpose.msra.mxu0 0.0
  %477 = vmatpush.xpose.msra.mxu0 %v386
  %478 = vmatpush.xpose.msra.mxu0 %v385
  %479 = vmatpush.xpose.msra.mxu0 %v384
  %480 = vmatpush.xpose.msra.mxu0 %v383
  %481 = vmatpush.xpose.msra.mxu0 %v382
  %482 = vmatpush.xpose.msra.mxu0 %v381
  %483 = vmatpush.xpose.msra.mxu0 %v380
  %484 = vmatpush.xpose.msra.mxu0 %v379
  %485 = vmatmul.f32.gmra.mxu0 %v405
  %v486 = vpop.f32.mrf.mxu0
  %v487 = vadd.f32 %v446, %v486
  %488 = vmatmul.f32.gmra.mxu0 %v408
  %v489 = vpop.f32.mrf.mxu0
  %v490 = vadd.f32 %v449, %v489
  %491 = vmatmul.f32.gmra.mxu0 %v411
  %v492 = vpop.f32.mrf.mxu0
  %v493 = vadd.f32 %v452, %v492
  %494 = vmatmul.f32.gmra.mxu0 %v414
  %v495 = vpop.f32.mrf.mxu0
  %v496 = vadd.f32 %v455, %v495
  %497 = vmatmul.f32.gmra.mxu0 %v417
  %v498 = vpop.f32.mrf.mxu0
  %v499 = vadd.f32 %v458, %v498
  %500 = vmatmul.f32.gmra.mxu0 %v420
  %v501 = vpop.f32.mrf.mxu0
  %v502 = vadd.f32 %v461, %v501
  %503 = vmatmul.f32.gmra.mxu0 %v423
  %v504 = vpop.f32.mrf.mxu0
  %v505 = vadd.f32 %v464, %v504
  %506 = vmatmul.f32.gmra.mxu0 %v426
  %v507 = vpop.f32.mrf.mxu0
  %v508 = vadd.f32 %v467, %v507
  %509 = vdwg.mxu0
  %v510 = vadd.f32 %v487, %v116
  %v511 = vadd.f32 %v490, %v117
  %v512 = vadd.f32 %v493, %v118
  %v513 = vadd.f32 %v496, %v119
  %v514 = vadd.f32 %v499, %v120
  %v515 = vadd.f32 %v502, %v121
  %v516 = vadd.f32 %v505, %v122
  %v517 = vadd.f32 %v508, %v123
  %vm518 = vcmask 523264
  %v519 = vsel %vm518, %v510, -inf
  %520 = vmax.xlane.f32.xlu0 %v519
  %v521 = vpop.xlane.xlu0 %520
  %v522 = vsel %vm518, %v511, -inf
  %523 = vmax.xlane.f32.xlu0 %v522
  %v524 = vpop.xlane.xlu0 %523
  %v525 = vsel %vm518, %v512, -inf
  %526 = vmax.xlane.f32.xlu0 %v525
  %v527 = vpop.xlane.xlu0 %526
  %v528 = vsel %vm518, %v513, -inf
  %529 = vmax.xlane.f32.xlu0 %v528
  %v530 = vpop.xlane.xlu0 %529
  %v531 = vsel %vm518, %v514, -inf
  %532 = vmax.xlane.f32.xlu0 %v531
  %v533 = vpop.xlane.xlu0 %532
  %v534 = vsel %vm518, %v515, -inf
  %535 = vmax.xlane.f32.xlu0 %v534
  %v536 = vpop.xlane.xlu0 %535
  %v537 = vsel %vm518, %v516, -inf
  %538 = vmax.xlane.f32.xlu0 %v537
  %v539 = vpop.xlane.xlu0 %538
  %v540 = vsel %vm518, %v517, -inf
  %541 = vmax.xlane.f32.xlu0 %v540
  %v542 = vpop.xlane.xlu0 %541
  %v543 = vsub.f32 %v510, %v521
  %v544 = vsub.f32 %v511, %v524
  %v545 = vsub.f32 %v512, %v527
  %v546 = vsub.f32 %v513, %v530
  %v547 = vsub.f32 %v514, %v533
  %v548 = vsub.f32 %v515, %v536
  %v549 = vsub.f32 %v516, %v539
  %v550 = vsub.f32 %v517, %v542
  %v551 = vmul.f32 %v543, 1.442695
  %v552 = vpow.pop %v551
  %v553 = vmul.f32 %v544, 1.442695
  %v554 = vpow.pop %v553
  %v555 = vmul.f32 %v545, 1.442695
  %v556 = vpow.pop %v555
  %v557 = vmul.f32 %v546, 1.442695
  %v558 = vpow.pop %v557
  %v559 = vmul.f32 %v547, 1.442695
  %v560 = vpow.pop %v559
  %v561 = vmul.f32 %v548, 1.442695
  %v562 = vpow.pop %v561
  %v563 = vmul.f32 %v549, 1.442695
  %v564 = vpow.pop %v563
  %v565 = vmul.f32 %v550, 1.442695
  %v566 = vpow.pop %v565
  %v567 = vsel %vm518, %v552, 0.0
  %568 = vadd.xlane.f32.xlu0 %v567
  %v569 = vpop.xlane.xlu0 %568
  %v570 = vsel %vm518, %v554, 0.0
  %571 = vadd.xlane.f32.xlu0 %v570
  %v572 = vpop.xlane.xlu0 %571
  %v573 = vsel %vm518, %v556, 0.0
  %574 = vadd.xlane.f32.xlu0 %v573
  %v575 = vpop.xlane.xlu0 %574
  %v576 = vsel %vm518, %v558, 0.0
  %577 = vadd.xlane.f32.xlu0 %v576
  %v578 = vpop.xlane.xlu0 %577
  %v579 = vsel %vm518, %v560, 0.0
  %580 = vadd.xlane.f32.xlu0 %v579
  %v581 = vpop.xlane.xlu0 %580
  %v582 = vsel %vm518, %v562, 0.0
  %583 = vadd.xlane.f32.xlu0 %v582
  %v584 = vpop.xlane.xlu0 %583
  %v585 = vsel %vm518, %v564, 0.0
  %586 = vadd.xlane.f32.xlu0 %v585
  %v587 = vpop.xlane.xlu0 %586
  %v588 = vsel %vm518, %v566, 0.0
  %589 = vadd.xlane.f32.xlu0 %v588
  %v590 = vpop.xlane.xlu0 %589
  %v591 = vrcp.pop %v569
  %v592 = vrcp.pop %v572
  %v593 = vrcp.pop %v575
  %v594 = vrcp.pop %v578
  %v595 = vrcp.pop %v581
  %v596 = vrcp.pop %v584
  %v597 = vrcp.pop %v587
  %v598 = vrcp.pop %v590
  %v599 = vmul.f32 %v552, %v591
  %v600 = vmul.f32 %v554, %v592
  %v601 = vmul.f32 %v556, %v593
  %v602 = vmul.f32 %v558, %v594
  %v603 = vmul.f32 %v560, %v595
  %v604 = vmul.f32 %v562, %v596
  %v605 = vmul.f32 %v564, %v597
  %v606 = vmul.f32 %v566, %v598
  %607 = vmatpush.msra.mxu0 %v139
  %608 = vmatpush.msra.mxu0 %v138
  %609 = vmatpush.msra.mxu0 %v137
  %610 = vmatpush.msra.mxu0 %v136
  %611 = vmatpush.msra.mxu0 %v135
  %612 = vmatpush.msra.mxu0 %v134
  %613 = vmatpush.msra.mxu0 %v133
  %614 = vmatpush.msra.mxu0 %v132
  %615 = vmatpush.msra.mxu0 %v131
  %616 = vmatpush.msra.mxu0 %v130
  %617 = vmatpush.msra.mxu0 %v129
  %618 = vmatpush.msra.mxu0 %v128
  %619 = vmatpush.msra.mxu0 %v127
  %620 = vmatpush.msra.mxu0 %v126
  %621 = vmatpush.msra.mxu0 %v125
  %622 = vmatpush.msra.mxu0 %v124
  %623 = vmatmul.f32.gmra.mxu0 %v379
  %v624 = vpop.f32.mrf.mxu0
  %v625 = vadd.f32 %v140, %v624
  %626 = vmatmul.f32.gmra.mxu0 %v380
  %v627 = vpop.f32.mrf.mxu0
  %v628 = vadd.f32 %v141, %v627
  %629 = vmatmul.f32.gmra.mxu0 %v381
  %v630 = vpop.f32.mrf.mxu0
  %v631 = vadd.f32 %v142, %v630
  %632 = vmatmul.f32.gmra.mxu0 %v382
  %v633 = vpop.f32.mrf.mxu0
  %v634 = vadd.f32 %v143, %v633
  %635 = vmatmul.f32.gmra.mxu0 %v383
  %v636 = vpop.f32.mrf.mxu0
  %v637 = vadd.f32 %v144, %v636
  %638 = vmatmul.f32.gmra.mxu0 %v384
  %v639 = vpop.f32.mrf.mxu0
  %v640 = vadd.f32 %v145, %v639
  %641 = vmatmul.f32.gmra.mxu0 %v385
  %v642 = vpop.f32.mrf.mxu0
  %v643 = vadd.f32 %v146, %v642
  %644 = vmatmul.f32.gmra.mxu0 %v386
  %v645 = vpop.f32.mrf.mxu0
  %v646 = vadd.f32 %v147, %v645
  %647 = vdwg.mxu0
  %v649 = vsel %vm518, %v599, 0
  %v652 = vsel %vm518, %v600, 0
  %v655 = vsel %vm518, %v601, 0
  %v658 = vsel %vm518, %v602, 0
  %v661 = vsel %vm518, %v603, 0
  %v664 = vsel %vm518, %v604, 0
  %v667 = vsel %vm518, %v605, 0
  %v670 = vsel %vm518, %v606, 0
  %672 = vmatpush.msra.mxu0 0.0
  %673 = vmatpush.msra.mxu0 0.0
  %674 = vmatpush.msra.mxu0 0.0
  %675 = vmatpush.msra.mxu0 0.0
  %676 = vmatpush.msra.mxu0 0.0
  %677 = vmatpush.msra.mxu0 0.0
  %678 = vmatpush.msra.mxu0 0.0
  %679 = vmatpush.msra.mxu0 0.0
  %680 = vmatpush.msra.mxu0 %v646
  %681 = vmatpush.msra.mxu0 %v643
  %682 = vmatpush.msra.mxu0 %v640
  %683 = vmatpush.msra.mxu0 %v637
  %684 = vmatpush.msra.mxu0 %v634
  %685 = vmatpush.msra.mxu0 %v631
  %686 = vmatpush.msra.mxu0 %v628
  %687 = vmatpush.msra.mxu0 %v625
  %688 = vmatmul.f32.gmra.mxu0 %v649
  %v689 = vpop.f32.mrf.mxu0
  %v690 = vadd.f32 0.0, %v689
  %691 = vmatmul.f32.gmra.mxu0 %v652
  %v692 = vpop.f32.mrf.mxu0
  %v693 = vadd.f32 0.0, %v692
  %694 = vmatmul.f32.gmra.mxu0 %v655
  %v695 = vpop.f32.mrf.mxu0
  %v696 = vadd.f32 0.0, %v695
  %697 = vmatmul.f32.gmra.mxu0 %v658
  %v698 = vpop.f32.mrf.mxu0
  %v699 = vadd.f32 0.0, %v698
  %700 = vmatmul.f32.gmra.mxu0 %v661
  %v701 = vpop.f32.mrf.mxu0
  %v702 = vadd.f32 0.0, %v701
  %703 = vmatmul.f32.gmra.mxu0 %v664
  %v704 = vpop.f32.mrf.mxu0
  %v705 = vadd.f32 0.0, %v704
  %706 = vmatmul.f32.gmra.mxu0 %v667
  %v707 = vpop.f32.mrf.mxu0
  %v708 = vadd.f32 0.0, %v707
  %709 = vmatmul.f32.gmra.mxu0 %v670
  %v710 = vpop.f32.mrf.mxu0
  %v711 = vadd.f32 0.0, %v710
  %712 = vdwg.mxu0
  %v713 = vmul.f32 %v690, %v68
  %v714 = vmul.f32 %v693, %v69
  %v715 = vmul.f32 %v696, %v70
  %v716 = vmul.f32 %v699, %v71
  %v717 = vmul.f32 %v702, %v72
  %v718 = vmul.f32 %v705, %v73
  %v719 = vmul.f32 %v708, %v74
  %v720 = vmul.f32 %v711, %v75
  %721 = vmatpush.msra.mxu0 %v163
  %722 = vmatpush.msra.mxu0 %v162
  %723 = vmatpush.msra.mxu0 %v161
  %724 = vmatpush.msra.mxu0 %v160
  %725 = vmatpush.msra.mxu0 %v159
  %726 = vmatpush.msra.mxu0 %v158
  %727 = vmatpush.msra.mxu0 %v157
  %728 = vmatpush.msra.mxu0 %v156
  %729 = vmatpush.msra.mxu0 %v155
  %730 = vmatpush.msra.mxu0 %v154
  %731 = vmatpush.msra.mxu0 %v153
  %732 = vmatpush.msra.mxu0 %v152
  %733 = vmatpush.msra.mxu0 %v151
  %734 = vmatpush.msra.mxu0 %v150
  %735 = vmatpush.msra.mxu0 %v149
  %736 = vmatpush.msra.mxu0 %v148
  %737 = vmatmul.f32.gmra.mxu0 %v713
  %v738 = vpop.f32.mrf.mxu0
  %v739 = vadd.f32 0.0, %v738
  %740 = vmatmul.f32.gmra.mxu0 %v714
  %v741 = vpop.f32.mrf.mxu0
  %v742 = vadd.f32 0.0, %v741
  %743 = vmatmul.f32.gmra.mxu0 %v715
  %v744 = vpop.f32.mrf.mxu0
  %v745 = vadd.f32 0.0, %v744
  %746 = vmatmul.f32.gmra.mxu0 %v716
  %v747 = vpop.f32.mrf.mxu0
  %v748 = vadd.f32 0.0, %v747
  %749 = vmatmul.f32.gmra.mxu0 %v717
  %v750 = vpop.f32.mrf.mxu0
  %v751 = vadd.f32 0.0, %v750
  %752 = vmatmul.f32.gmra.mxu0 %v718
  %v753 = vpop.f32.mrf.mxu0
  %v754 = vadd.f32 0.0, %v753
  %755 = vmatmul.f32.gmra.mxu0 %v719
  %v756 = vpop.f32.mrf.mxu0
  %v757 = vadd.f32 0.0, %v756
  %758 = vmatmul.f32.gmra.mxu0 %v720
  %v759 = vpop.f32.mrf.mxu0
  %v760 = vadd.f32 0.0, %v759
  %761 = vdwg.mxu0
  %v763 = vperm.slane %v164, 0
  %v765 = vadd.f32 %v763, %v739
  %v766 = vadd.f32 %v763, %v742
  %v767 = vadd.f32 %v765, %v745
  %v768 = vadd.f32 %v766, %v748
  %v769 = vadd.f32 %v767, %v751
  %v770 = vadd.f32 %v768, %v754
  %v771 = vadd.f32 %v769, %v757
  %v772 = vadd.f32 %v770, %v760
  %v773 = vadd.f32 %v771, %v62
  %v774 = vadd.f32 %v772, %v63
  %v775 = vsel %vm331, %v773, 0.0
  %776 = vadd.xlane.f32.xlu0 %v775
  %v777 = vpop.xlane.xlu0 %776
  %v778 = vsel %vm331, %v774, 0.0
  %779 = vadd.xlane.f32.xlu0 %v778
  %v780 = vpop.xlane.xlu0 %779
  %v781 = vrcp.pop 32.0
  %v782 = vmul.f32 32.0, %v781
  %v783 = vsub.f32 1.0, %v782
  %v784 = vmul.f32 %v781, %v783
  %v785 = vadd.f32 %v781, %v784
  %vm786 = vweird.f32 %v781
  %v787 = vsel %vm786, %v781, %v785
  %v788 = vmul.f32 %v777, %v787
  %v789 = vmul.f32 %v780, %v787
  %v790 = vsub.f32 %v773, %v788
  %v791 = vsub.f32 %v774, %v789
  %v792 = vmul.f32 %v790, %v790
  %v793 = vmul.f32 %v791, %v791
  %v794 = vsel %vm331, %v792, 0.0
  %795 = vadd.xlane.f32.xlu0 %v794
  %v796 = vpop.xlane.xlu0 %795
  %v797 = vsel %vm331, %v793, 0.0
  %798 = vadd.xlane.f32.xlu0 %v797
  %v799 = vpop.xlane.xlu0 %798
  %v800 = vmul.f32 %v796, %v787
  %v801 = vmul.f32 %v799, %v787
  %v802 = vadd.f32 %v800, 1e-05
  %v803 = vadd.f32 %v801, 1e-05
  %v804 = vrsqrt.pop %v802
  %v805 = vmul.f32 %v804, %v802
  %v806 = vmul.f32 %v805, %v804
  %v807 = vmul.f32 0.5, %v806
  %v808 = vsub.f32 1.5, %v807
  %v809 = vmul.f32 %v804, %v808
  %vm810 = vweird.f32 %v802
  %vm811 = vweird.f32 %v804
  %vm812 = vmor %vm810, %vm811
  %v813 = vsel %vm812, %v804, %v809
  %v814 = vrsqrt.pop %v803
  %v815 = vmul.f32 %v814, %v803
  %v816 = vmul.f32 %v815, %v814
  %v817 = vmul.f32 0.5, %v816
  %v818 = vsub.f32 1.5, %v817
  %v819 = vmul.f32 %v814, %v818
  %vm820 = vweird.f32 %v803
  %vm821 = vweird.f32 %v814
  %vm822 = vmor %vm820, %vm821
  %v823 = vsel %vm822, %v814, %v819
  %v824 = vmul.f32 %v790, %v813
  %v825 = vmul.f32 %v791, %v823
  %v827 = vperm.slane %v165, 0
  %v829 = vmul.f32 %v824, %v827
  %v830 = vmul.f32 %v825, %v827
  %v832 = vperm.slane %v166, 0
  %v834 = vadd.f32 %v829, %v832
  %v835 = vadd.f32 %v830, %v832
  %v837 = vperm.slane %v199, 0
  %v838 = vperm.slane %v199, 1
  %v839 = vperm.slane %v199, 2
  %v840 = vperm.slane %v199, 3
  %v841 = vperm.slane %v199, 4
  %v842 = vperm.slane %v199, 5
  %v843 = vperm.slane %v199, 6
  %v844 = vperm.slane %v199, 7
  %v854 = vsel %vm331, %v834, 0
  %v857 = vsel %vm331, %v835, 0
  %859 = vmatpush.msra.mxu0 0.0
  %860 = vmatpush.msra.mxu0 0.0
  %861 = vmatpush.msra.mxu0 0.0
  %862 = vmatpush.msra.mxu0 0.0
  %863 = vmatpush.msra.mxu0 0.0
  %864 = vmatpush.msra.mxu0 0.0
  %865 = vmatpush.msra.mxu0 0.0
  %866 = vmatpush.msra.mxu0 0.0
  %867 = vmatpush.msra.mxu0 0.0
  %868 = vmatpush.msra.mxu0 0.0
  %869 = vmatpush.msra.mxu0 0.0
  %870 = vmatpush.msra.mxu0 0.0
  %871 = vmatpush.msra.mxu0 %v191
  %872 = vmatpush.msra.mxu0 %v183
  %873 = vmatpush.msra.mxu0 %v175
  %874 = vmatpush.msra.mxu0 %v167
  %875 = vmatmul.f32.gmra.mxu0 %v854
  %v876 = vpop.f32.mrf.mxu0
  %v877 = vadd.f32 %v837, %v876
  %878 = vmatmul.f32.gmra.mxu0 %v857
  %v879 = vpop.f32.mrf.mxu0
  %v880 = vadd.f32 %v837, %v879
  %881 = vdwg.mxu0
  %882 = vmatpush.msra.mxu0 0.0
  %883 = vmatpush.msra.mxu0 0.0
  %884 = vmatpush.msra.mxu0 0.0
  %885 = vmatpush.msra.mxu0 0.0
  %886 = vmatpush.msra.mxu0 0.0
  %887 = vmatpush.msra.mxu0 0.0
  %888 = vmatpush.msra.mxu0 0.0
  %889 = vmatpush.msra.mxu0 0.0
  %890 = vmatpush.msra.mxu0 0.0
  %891 = vmatpush.msra.mxu0 0.0
  %892 = vmatpush.msra.mxu0 0.0
  %893 = vmatpush.msra.mxu0 0.0
  %894 = vmatpush.msra.mxu0 %v192
  %895 = vmatpush.msra.mxu0 %v184
  %896 = vmatpush.msra.mxu0 %v176
  %897 = vmatpush.msra.mxu0 %v168
  %898 = vmatmul.f32.gmra.mxu0 %v854
  %v899 = vpop.f32.mrf.mxu0
  %v900 = vadd.f32 %v838, %v899
  %901 = vmatmul.f32.gmra.mxu0 %v857
  %v902 = vpop.f32.mrf.mxu0
  %v903 = vadd.f32 %v838, %v902
  %904 = vdwg.mxu0
  %905 = vmatpush.msra.mxu0 0.0
  %906 = vmatpush.msra.mxu0 0.0
  %907 = vmatpush.msra.mxu0 0.0
  %908 = vmatpush.msra.mxu0 0.0
  %909 = vmatpush.msra.mxu0 0.0
  %910 = vmatpush.msra.mxu0 0.0
  %911 = vmatpush.msra.mxu0 0.0
  %912 = vmatpush.msra.mxu0 0.0
  %913 = vmatpush.msra.mxu0 0.0
  %914 = vmatpush.msra.mxu0 0.0
  %915 = vmatpush.msra.mxu0 0.0
  %916 = vmatpush.msra.mxu0 0.0
  %917 = vmatpush.msra.mxu0 %v193
  %918 = vmatpush.msra.mxu0 %v185
  %919 = vmatpush.msra.mxu0 %v177
  %920 = vmatpush.msra.mxu0 %v169
  %921 = vmatmul.f32.gmra.mxu0 %v854
  %v922 = vpop.f32.mrf.mxu0
  %v923 = vadd.f32 %v839, %v922
  %924 = vmatmul.f32.gmra.mxu0 %v857
  %v925 = vpop.f32.mrf.mxu0
  %v926 = vadd.f32 %v839, %v925
  %927 = vdwg.mxu0
  %928 = vmatpush.msra.mxu0 0.0
  %929 = vmatpush.msra.mxu0 0.0
  %930 = vmatpush.msra.mxu0 0.0
  %931 = vmatpush.msra.mxu0 0.0
  %932 = vmatpush.msra.mxu0 0.0
  %933 = vmatpush.msra.mxu0 0.0
  %934 = vmatpush.msra.mxu0 0.0
  %935 = vmatpush.msra.mxu0 0.0
  %936 = vmatpush.msra.mxu0 0.0
  %937 = vmatpush.msra.mxu0 0.0
  %938 = vmatpush.msra.mxu0 0.0
  %939 = vmatpush.msra.mxu0 0.0
  %940 = vmatpush.msra.mxu0 %v194
  %941 = vmatpush.msra.mxu0 %v186
  %942 = vmatpush.msra.mxu0 %v178
  %943 = vmatpush.msra.mxu0 %v170
  %944 = vmatmul.f32.gmra.mxu0 %v854
  %v945 = vpop.f32.mrf.mxu0
  %v946 = vadd.f32 %v840, %v945
  %947 = vmatmul.f32.gmra.mxu0 %v857
  %v948 = vpop.f32.mrf.mxu0
  %v949 = vadd.f32 %v840, %v948
  %950 = vdwg.mxu0
  %951 = vmatpush.msra.mxu0 0.0
  %952 = vmatpush.msra.mxu0 0.0
  %953 = vmatpush.msra.mxu0 0.0
  %954 = vmatpush.msra.mxu0 0.0
  %955 = vmatpush.msra.mxu0 0.0
  %956 = vmatpush.msra.mxu0 0.0
  %957 = vmatpush.msra.mxu0 0.0
  %958 = vmatpush.msra.mxu0 0.0
  %959 = vmatpush.msra.mxu0 0.0
  %960 = vmatpush.msra.mxu0 0.0
  %961 = vmatpush.msra.mxu0 0.0
  %962 = vmatpush.msra.mxu0 0.0
  %963 = vmatpush.msra.mxu0 %v195
  %964 = vmatpush.msra.mxu0 %v187
  %965 = vmatpush.msra.mxu0 %v179
  %966 = vmatpush.msra.mxu0 %v171
  %967 = vmatmul.f32.gmra.mxu0 %v854
  %v968 = vpop.f32.mrf.mxu0
  %v969 = vadd.f32 %v841, %v968
  %970 = vmatmul.f32.gmra.mxu0 %v857
  %v971 = vpop.f32.mrf.mxu0
  %v972 = vadd.f32 %v841, %v971
  %973 = vdwg.mxu0
  %974 = vmatpush.msra.mxu0 0.0
  %975 = vmatpush.msra.mxu0 0.0
  %976 = vmatpush.msra.mxu0 0.0
  %977 = vmatpush.msra.mxu0 0.0
  %978 = vmatpush.msra.mxu0 0.0
  %979 = vmatpush.msra.mxu0 0.0
  %980 = vmatpush.msra.mxu0 0.0
  %981 = vmatpush.msra.mxu0 0.0
  %982 = vmatpush.msra.mxu0 0.0
  %983 = vmatpush.msra.mxu0 0.0
  %984 = vmatpush.msra.mxu0 0.0
  %985 = vmatpush.msra.mxu0 0.0
  %986 = vmatpush.msra.mxu0 %v196
  %987 = vmatpush.msra.mxu0 %v188
  %988 = vmatpush.msra.mxu0 %v180
  %989 = vmatpush.msra.mxu0 %v172
  %990 = vmatmul.f32.gmra.mxu0 %v854
  %v991 = vpop.f32.mrf.mxu0
  %v992 = vadd.f32 %v842, %v991
  %993 = vmatmul.f32.gmra.mxu0 %v857
  %v994 = vpop.f32.mrf.mxu0
  %v995 = vadd.f32 %v842, %v994
  %996 = vdwg.mxu0
  %997 = vmatpush.msra.mxu0 0.0
  %998 = vmatpush.msra.mxu0 0.0
  %999 = vmatpush.msra.mxu0 0.0
  %1000 = vmatpush.msra.mxu0 0.0
  %1001 = vmatpush.msra.mxu0 0.0
  %1002 = vmatpush.msra.mxu0 0.0
  %1003 = vmatpush.msra.mxu0 0.0
  %1004 = vmatpush.msra.mxu0 0.0
  %1005 = vmatpush.msra.mxu0 0.0
  %1006 = vmatpush.msra.mxu0 0.0
  %1007 = vmatpush.msra.mxu0 0.0
  %1008 = vmatpush.msra.mxu0 0.0
  %1009 = vmatpush.msra.mxu0 %v197
  %1010 = vmatpush.msra.mxu0 %v189
  %1011 = vmatpush.msra.mxu0 %v181
  %1012 = vmatpush.msra.mxu0 %v173
  %1013 = vmatmul.f32.gmra.mxu0 %v854
  %v1014 = vpop.f32.mrf.mxu0
  %v1015 = vadd.f32 %v843, %v1014
  %1016 = vmatmul.f32.gmra.mxu0 %v857
  %v1017 = vpop.f32.mrf.mxu0
  %v1018 = vadd.f32 %v843, %v1017
  %1019 = vdwg.mxu0
  %1020 = vmatpush.msra.mxu0 0.0
  %1021 = vmatpush.msra.mxu0 0.0
  %1022 = vmatpush.msra.mxu0 0.0
  %1023 = vmatpush.msra.mxu0 0.0
  %1024 = vmatpush.msra.mxu0 0.0
  %1025 = vmatpush.msra.mxu0 0.0
  %1026 = vmatpush.msra.mxu0 0.0
  %1027 = vmatpush.msra.mxu0 0.0
  %1028 = vmatpush.msra.mxu0 0.0
  %1029 = vmatpush.msra.mxu0 0.0
  %1030 = vmatpush.msra.mxu0 0.0
  %1031 = vmatpush.msra.mxu0 0.0
  %1032 = vmatpush.msra.mxu0 %v198
  %1033 = vmatpush.msra.mxu0 %v190
  %1034 = vmatpush.msra.mxu0 %v182
  %1035 = vmatpush.msra.mxu0 %v174
  %1036 = vmatmul.f32.gmra.mxu0 %v854
  %v1037 = vpop.f32.mrf.mxu0
  %v1038 = vadd.f32 %v844, %v1037
  %1039 = vmatmul.f32.gmra.mxu0 %v857
  %v1040 = vpop.f32.mrf.mxu0
  %v1041 = vadd.f32 %v844, %v1040
  %1042 = vdwg.mxu0
  %v1043 = vmax.f32 %v877, 0.0
  %v1044 = vmax.f32 %v900, 0.0
  %v1045 = vmax.f32 %v923, 0.0
  %v1046 = vmax.f32 %v946, 0.0
  %v1047 = vmax.f32 %v969, 0.0
  %v1048 = vmax.f32 %v992, 0.0
  %v1049 = vmax.f32 %v1015, 0.0
  %v1050 = vmax.f32 %v1038, 0.0
  %v1051 = vmax.f32 %v880, 0.0
  %v1052 = vmax.f32 %v903, 0.0
  %v1053 = vmax.f32 %v926, 0.0
  %v1054 = vmax.f32 %v949, 0.0
  %v1055 = vmax.f32 %v972, 0.0
  %v1056 = vmax.f32 %v995, 0.0
  %v1057 = vmax.f32 %v1018, 0.0
  %v1058 = vmax.f32 %v1041, 0.0
  %v1060 = vperm.slane %v328, 0
  %1062 = vmatpush.msra.mxu0 %v215
  %1063 = vmatpush.msra.mxu0 %v214
  %1064 = vmatpush.msra.mxu0 %v213
  %1065 = vmatpush.msra.mxu0 %v212
  %1066 = vmatpush.msra.mxu0 %v211
  %1067 = vmatpush.msra.mxu0 %v210
  %1068 = vmatpush.msra.mxu0 %v209
  %1069 = vmatpush.msra.mxu0 %v208
  %1070 = vmatpush.msra.mxu0 %v207
  %1071 = vmatpush.msra.mxu0 %v206
  %1072 = vmatpush.msra.mxu0 %v205
  %1073 = vmatpush.msra.mxu0 %v204
  %1074 = vmatpush.msra.mxu0 %v203
  %1075 = vmatpush.msra.mxu0 %v202
  %1076 = vmatpush.msra.mxu0 %v201
  %1077 = vmatpush.msra.mxu0 %v200
  %1078 = vmatmul.f32.gmra.mxu0 %v1043
  %v1079 = vpop.f32.mrf.mxu0
  %v1080 = vadd.f32 %v1060, %v1079
  %1081 = vmatmul.f32.gmra.mxu0 %v1051
  %v1082 = vpop.f32.mrf.mxu0
  %v1083 = vadd.f32 %v1060, %v1082
  %1084 = vdwg.mxu0
  %1085 = vmatpush.msra.mxu0 %v231
  %1086 = vmatpush.msra.mxu0 %v230
  %1087 = vmatpush.msra.mxu0 %v229
  %1088 = vmatpush.msra.mxu0 %v228
  %1089 = vmatpush.msra.mxu0 %v227
  %1090 = vmatpush.msra.mxu0 %v226
  %1091 = vmatpush.msra.mxu0 %v225
  %1092 = vmatpush.msra.mxu0 %v224
  %1093 = vmatpush.msra.mxu0 %v223
  %1094 = vmatpush.msra.mxu0 %v222
  %1095 = vmatpush.msra.mxu0 %v221
  %1096 = vmatpush.msra.mxu0 %v220
  %1097 = vmatpush.msra.mxu0 %v219
  %1098 = vmatpush.msra.mxu0 %v218
  %1099 = vmatpush.msra.mxu0 %v217
  %1100 = vmatpush.msra.mxu0 %v216
  %1101 = vmatmul.f32.gmra.mxu0 %v1044
  %v1102 = vpop.f32.mrf.mxu0
  %v1103 = vadd.f32 %v1080, %v1102
  %1104 = vmatmul.f32.gmra.mxu0 %v1052
  %v1105 = vpop.f32.mrf.mxu0
  %v1106 = vadd.f32 %v1083, %v1105
  %1107 = vdwg.mxu0
  %1108 = vmatpush.msra.mxu0 %v247
  %1109 = vmatpush.msra.mxu0 %v246
  %1110 = vmatpush.msra.mxu0 %v245
  %1111 = vmatpush.msra.mxu0 %v244
  %1112 = vmatpush.msra.mxu0 %v243
  %1113 = vmatpush.msra.mxu0 %v242
  %1114 = vmatpush.msra.mxu0 %v241
  %1115 = vmatpush.msra.mxu0 %v240
  %1116 = vmatpush.msra.mxu0 %v239
  %1117 = vmatpush.msra.mxu0 %v238
  %1118 = vmatpush.msra.mxu0 %v237
  %1119 = vmatpush.msra.mxu0 %v236
  %1120 = vmatpush.msra.mxu0 %v235
  %1121 = vmatpush.msra.mxu0 %v234
  %1122 = vmatpush.msra.mxu0 %v233
  %1123 = vmatpush.msra.mxu0 %v232
  %1124 = vmatmul.f32.gmra.mxu0 %v1045
  %v1125 = vpop.f32.mrf.mxu0
  %v1126 = vadd.f32 %v1103, %v1125
  %1127 = vmatmul.f32.gmra.mxu0 %v1053
  %v1128 = vpop.f32.mrf.mxu0
  %v1129 = vadd.f32 %v1106, %v1128
  %1130 = vdwg.mxu0
  %1131 = vmatpush.msra.mxu0 %v263
  %1132 = vmatpush.msra.mxu0 %v262
  %1133 = vmatpush.msra.mxu0 %v261
  %1134 = vmatpush.msra.mxu0 %v260
  %1135 = vmatpush.msra.mxu0 %v259
  %1136 = vmatpush.msra.mxu0 %v258
  %1137 = vmatpush.msra.mxu0 %v257
  %1138 = vmatpush.msra.mxu0 %v256
  %1139 = vmatpush.msra.mxu0 %v255
  %1140 = vmatpush.msra.mxu0 %v254
  %1141 = vmatpush.msra.mxu0 %v253
  %1142 = vmatpush.msra.mxu0 %v252
  %1143 = vmatpush.msra.mxu0 %v251
  %1144 = vmatpush.msra.mxu0 %v250
  %1145 = vmatpush.msra.mxu0 %v249
  %1146 = vmatpush.msra.mxu0 %v248
  %1147 = vmatmul.f32.gmra.mxu0 %v1046
  %v1148 = vpop.f32.mrf.mxu0
  %v1149 = vadd.f32 %v1126, %v1148
  %1150 = vmatmul.f32.gmra.mxu0 %v1054
  %v1151 = vpop.f32.mrf.mxu0
  %v1152 = vadd.f32 %v1129, %v1151
  %1153 = vdwg.mxu0
  %1154 = vmatpush.msra.mxu0 %v279
  %1155 = vmatpush.msra.mxu0 %v278
  %1156 = vmatpush.msra.mxu0 %v277
  %1157 = vmatpush.msra.mxu0 %v276
  %1158 = vmatpush.msra.mxu0 %v275
  %1159 = vmatpush.msra.mxu0 %v274
  %1160 = vmatpush.msra.mxu0 %v273
  %1161 = vmatpush.msra.mxu0 %v272
  %1162 = vmatpush.msra.mxu0 %v271
  %1163 = vmatpush.msra.mxu0 %v270
  %1164 = vmatpush.msra.mxu0 %v269
  %1165 = vmatpush.msra.mxu0 %v268
  %1166 = vmatpush.msra.mxu0 %v267
  %1167 = vmatpush.msra.mxu0 %v266
  %1168 = vmatpush.msra.mxu0 %v265
  %1169 = vmatpush.msra.mxu0 %v264
  %1170 = vmatmul.f32.gmra.mxu0 %v1047
  %v1171 = vpop.f32.mrf.mxu0
  %v1172 = vadd.f32 %v1149, %v1171
  %1173 = vmatmul.f32.gmra.mxu0 %v1055
  %v1174 = vpop.f32.mrf.mxu0
  %v1175 = vadd.f32 %v1152, %v1174
  %1176 = vdwg.mxu0
  %1177 = vmatpush.msra.mxu0 %v295
  %1178 = vmatpush.msra.mxu0 %v294
  %1179 = vmatpush.msra.mxu0 %v293
  %1180 = vmatpush.msra.mxu0 %v292
  %1181 = vmatpush.msra.mxu0 %v291
  %1182 = vmatpush.msra.mxu0 %v290
  %1183 = vmatpush.msra.mxu0 %v289
  %1184 = vmatpush.msra.mxu0 %v288
  %1185 = vmatpush.msra.mxu0 %v287
  %1186 = vmatpush.msra.mxu0 %v286
  %1187 = vmatpush.msra.mxu0 %v285
  %1188 = vmatpush.msra.mxu0 %v284
  %1189 = vmatpush.msra.mxu0 %v283
  %1190 = vmatpush.msra.mxu0 %v282
  %1191 = vmatpush.msra.mxu0 %v281
  %1192 = vmatpush.msra.mxu0 %v280
  %1193 = vmatmul.f32.gmra.mxu0 %v1048
  %v1194 = vpop.f32.mrf.mxu0
  %v1195 = vadd.f32 %v1172, %v1194
  %1196 = vmatmul.f32.gmra.mxu0 %v1056
  %v1197 = vpop.f32.mrf.mxu0
  %v1198 = vadd.f32 %v1175, %v1197
  %1199 = vdwg.mxu0
  %1200 = vmatpush.msra.mxu0 %v311
  %1201 = vmatpush.msra.mxu0 %v310
  %1202 = vmatpush.msra.mxu0 %v309
  %1203 = vmatpush.msra.mxu0 %v308
  %1204 = vmatpush.msra.mxu0 %v307
  %1205 = vmatpush.msra.mxu0 %v306
  %1206 = vmatpush.msra.mxu0 %v305
  %1207 = vmatpush.msra.mxu0 %v304
  %1208 = vmatpush.msra.mxu0 %v303
  %1209 = vmatpush.msra.mxu0 %v302
  %1210 = vmatpush.msra.mxu0 %v301
  %1211 = vmatpush.msra.mxu0 %v300
  %1212 = vmatpush.msra.mxu0 %v299
  %1213 = vmatpush.msra.mxu0 %v298
  %1214 = vmatpush.msra.mxu0 %v297
  %1215 = vmatpush.msra.mxu0 %v296
  %1216 = vmatmul.f32.gmra.mxu0 %v1049
  %v1217 = vpop.f32.mrf.mxu0
  %v1218 = vadd.f32 %v1195, %v1217
  %1219 = vmatmul.f32.gmra.mxu0 %v1057
  %v1220 = vpop.f32.mrf.mxu0
  %v1221 = vadd.f32 %v1198, %v1220
  %1222 = vdwg.mxu0
  %1223 = vmatpush.msra.mxu0 %v327
  %1224 = vmatpush.msra.mxu0 %v326
  %1225 = vmatpush.msra.mxu0 %v325
  %1226 = vmatpush.msra.mxu0 %v324
  %1227 = vmatpush.msra.mxu0 %v323
  %1228 = vmatpush.msra.mxu0 %v322
  %1229 = vmatpush.msra.mxu0 %v321
  %1230 = vmatpush.msra.mxu0 %v320
  %1231 = vmatpush.msra.mxu0 %v319
  %1232 = vmatpush.msra.mxu0 %v318
  %1233 = vmatpush.msra.mxu0 %v317
  %1234 = vmatpush.msra.mxu0 %v316
  %1235 = vmatpush.msra.mxu0 %v315
  %1236 = vmatpush.msra.mxu0 %v314
  %1237 = vmatpush.msra.mxu0 %v313
  %1238 = vmatpush.msra.mxu0 %v312
  %1239 = vmatmul.f32.gmra.mxu0 %v1050
  %v1240 = vpop.f32.mrf.mxu0
  %v1241 = vadd.f32 %v1218, %v1240
  %1242 = vmatmul.f32.gmra.mxu0 %v1058
  %v1243 = vpop.f32.mrf.mxu0
  %v1244 = vadd.f32 %v1221, %v1243
  %1245 = vdwg.mxu0
  %v1246 = vadd.f32 %v1241, %v834
  %v1247 = vadd.f32 %v1244, %v835
  %v1248 = vsel %vm331, %v1246, 0.0
  %1249 = vadd.xlane.f32.xlu0 %v1248
  %v1250 = vpop.xlane.xlu0 %1249
  %v1251 = vsel %vm331, %v1247, 0.0
  %1252 = vadd.xlane.f32.xlu0 %v1251
  %v1253 = vpop.xlane.xlu0 %1252
  %v1254 = vmul.f32 %v1250, %v787
  %v1255 = vmul.f32 %v1253, %v787
  %v1256 = vsub.f32 %v1246, %v1254
  %v1257 = vsub.f32 %v1247, %v1255
  %v1258 = vmul.f32 %v1256, %v1256
  %v1259 = vmul.f32 %v1257, %v1257
  %v1260 = vsel %vm331, %v1258, 0.0
  %1261 = vadd.xlane.f32.xlu0 %v1260
  %v1262 = vpop.xlane.xlu0 %1261
  %v1263 = vsel %vm331, %v1259, 0.0
  %1264 = vadd.xlane.f32.xlu0 %v1263
  %v1265 = vpop.xlane.xlu0 %1264
  %v1266 = vmul.f32 %v1262, %v787
  %v1267 = vmul.f32 %v1265, %v787
  %v1268 = vadd.f32 %v1266, 1e-05
  %v1269 = vadd.f32 %v1267, 1e-05
  %v1270 = vrsqrt.pop %v1268
  %v1271 = vmul.f32 %v1270, %v1268
  %v1272 = vmul.f32 %v1271, %v1270
  %v1273 = vmul.f32 0.5, %v1272
  %v1274 = vsub.f32 1.5, %v1273
  %v1275 = vmul.f32 %v1270, %v1274
  %vm1276 = vweird.f32 %v1268
  %vm1277 = vweird.f32 %v1270
  %vm1278 = vmor %vm1276, %vm1277
  %v1279 = vsel %vm1278, %v1270, %v1275
  %v1280 = vrsqrt.pop %v1269
  %v1281 = vmul.f32 %v1280, %v1269
  %v1282 = vmul.f32 %v1281, %v1280
  %v1283 = vmul.f32 0.5, %v1282
  %v1284 = vsub.f32 1.5, %v1283
  %v1285 = vmul.f32 %v1280, %v1284
  %vm1286 = vweird.f32 %v1269
  %vm1287 = vweird.f32 %v1280
  %vm1288 = vmor %vm1286, %vm1287
  %v1289 = vsel %vm1288, %v1280, %v1285
  %v1290 = vmul.f32 %v1256, %v1279
  %v1291 = vmul.f32 %v1257, %v1289
  %v1293 = vperm.slane %v329, 0
  %v1295 = vmul.f32 %v1290, %v1293
  %v1296 = vmul.f32 %v1291, %v1293
  %v1298 = vperm.slane %v330, 0
  %v1300 = vadd.f32 %v1295, %v1298
  %v1301 = vadd.f32 %v1296, %v1298
  %v1303 = vsel %vm331, %v1300, 0
  %v1306 = vsel %vm331, %v1301, 0
  %1308 = vmatpush.msra.mxu0 0.0
  %1309 = vmatpush.msra.mxu0 0.0
  %1310 = vmatpush.msra.mxu0 0.0
  %1311 = vmatpush.msra.mxu0 0.0
  %1312 = vmatpush.msra.mxu0 0.0
  %1313 = vmatpush.msra.mxu0 0.0
  %1314 = vmatpush.msra.mxu0 0.0
  %1315 = vmatpush.msra.mxu0 0.0
  %1316 = vmatpush.msra.mxu0 0.0
  %1317 = vmatpush.msra.mxu0 0.0
  %1318 = vmatpush.msra.mxu0 0.0
  %1319 = vmatpush.msra.mxu0 0.0
  %1320 = vmatpush.msra.mxu0 %v67
  %1321 = vmatpush.msra.mxu0 %v66
  %1322 = vmatpush.msra.mxu0 %v65
  %1323 = vmatpush.msra.mxu0 %v64
  %1324 = vmatmul.f32.gmra.mxu0 %v1303
  %v1325 = vpop.f32.mrf.mxu0
  %v1326 = vadd.f32 0.0, %v1325
  %1327 = vmatmul.f32.gmra.mxu0 %v1306
  %v1328 = vpop.f32.mrf.mxu0
  %v1329 = vadd.f32 0.0, %v1328
  %1330 = vmatmul.f32.gmra.mxu0 %v1303
  %v1331 = vpop.f32.mrf.mxu0
  %v1332 = vadd.f32 0.0, %v1331
  %1333 = vmatmul.f32.gmra.mxu0 %v1306
  %v1334 = vpop.f32.mrf.mxu0
  %v1335 = vadd.f32 0.0, %v1334
  %1336 = vmatmul.f32.gmra.mxu0 %v1303
  %v1337 = vpop.f32.mrf.mxu0
  %v1338 = vadd.f32 0.0, %v1337
  %1339 = vmatmul.f32.gmra.mxu0 %v1306
  %v1340 = vpop.f32.mrf.mxu0
  %v1341 = vadd.f32 0.0, %v1340
  %1342 = vmatmul.f32.gmra.mxu0 %v1303
  %v1343 = vpop.f32.mrf.mxu0
  %v1344 = vadd.f32 0.0, %v1343
  %1345 = vmatmul.f32.gmra.mxu0 %v1306
  %v1346 = vpop.f32.mrf.mxu0
  %v1347 = vadd.f32 0.0, %v1346
  %1348 = vdwg.mxu0
  %v1349 = vmul.f32 %v1326, %v68
  %v1350 = vmul.f32 %v1329, %v69
  %v1351 = vmul.f32 %v1332, %v70
  %v1352 = vmul.f32 %v1335, %v71
  %v1353 = vmul.f32 %v1338, %v72
  %v1354 = vmul.f32 %v1341, %v73
  %v1355 = vmul.f32 %v1344, %v74
  %v1356 = vmul.f32 %v1347, %v75
  %1357 = vmatpush.msra.mxu0 %v91
  %1358 = vmatpush.msra.mxu0 %v90
  %1359 = vmatpush.msra.mxu0 %v89
  %1360 = vmatpush.msra.mxu0 %v88
  %1361 = vmatpush.msra.mxu0 %v87
  %1362 = vmatpush.msra.mxu0 %v86
  %1363 = vmatpush.msra.mxu0 %v85
  %1364 = vmatpush.msra.mxu0 %v84
  %1365 = vmatpush.msra.mxu0 %v83
  %1366 = vmatpush.msra.mxu0 %v82
  %1367 = vmatpush.msra.mxu0 %v81
  %1368 = vmatpush.msra.mxu0 %v80
  %1369 = vmatpush.msra.mxu0 %v79
  %1370 = vmatpush.msra.mxu0 %v78
  %1371 = vmatpush.msra.mxu0 %v77
  %1372 = vmatpush.msra.mxu0 %v76
  %1373 = vmatmul.f32.gmra.mxu0 %v1349
  %v1374 = vpop.f32.mrf.mxu0
  %v1375 = vadd.f32 %v108, %v1374
  %1376 = vmatmul.f32.gmra.mxu0 %v1350
  %v1377 = vpop.f32.mrf.mxu0
  %v1378 = vadd.f32 %v109, %v1377
  %1379 = vmatmul.f32.gmra.mxu0 %v1351
  %v1380 = vpop.f32.mrf.mxu0
  %v1381 = vadd.f32 %v110, %v1380
  %1382 = vmatmul.f32.gmra.mxu0 %v1352
  %v1383 = vpop.f32.mrf.mxu0
  %v1384 = vadd.f32 %v111, %v1383
  %1385 = vmatmul.f32.gmra.mxu0 %v1353
  %v1386 = vpop.f32.mrf.mxu0
  %v1387 = vadd.f32 %v112, %v1386
  %1388 = vmatmul.f32.gmra.mxu0 %v1354
  %v1389 = vpop.f32.mrf.mxu0
  %v1390 = vadd.f32 %v113, %v1389
  %1391 = vmatmul.f32.gmra.mxu0 %v1355
  %v1392 = vpop.f32.mrf.mxu0
  %v1393 = vadd.f32 %v114, %v1392
  %1394 = vmatmul.f32.gmra.mxu0 %v1356
  %v1395 = vpop.f32.mrf.mxu0
  %v1396 = vadd.f32 %v115, %v1395
  %1397 = vdwg.mxu0
  %1398 = vmatpush.msra.mxu0 %v107
  %1399 = vmatpush.msra.mxu0 %v106
  %1400 = vmatpush.msra.mxu0 %v105
  %1401 = vmatpush.msra.mxu0 %v104
  %1402 = vmatpush.msra.mxu0 %v103
  %1403 = vmatpush.msra.mxu0 %v102
  %1404 = vmatpush.msra.mxu0 %v101
  %1405 = vmatpush.msra.mxu0 %v100
  %1406 = vmatpush.msra.mxu0 %v99
  %1407 = vmatpush.msra.mxu0 %v98
  %1408 = vmatpush.msra.mxu0 %v97
  %1409 = vmatpush.msra.mxu0 %v96
  %1410 = vmatpush.msra.mxu0 %v95
  %1411 = vmatpush.msra.mxu0 %v94
  %1412 = vmatpush.msra.mxu0 %v93
  %1413 = vmatpush.msra.mxu0 %v92
  %1414 = vmatmul.f32.gmra.mxu0 %v1349
  %v1415 = vpop.f32.mrf.mxu0
  %v1416 = vadd.f32 0.0, %v1415
  %1417 = vmatmul.f32.gmra.mxu0 %v1350
  %v1418 = vpop.f32.mrf.mxu0
  %v1419 = vadd.f32 0.0, %v1418
  %1420 = vmatmul.f32.gmra.mxu0 %v1351
  %v1421 = vpop.f32.mrf.mxu0
  %v1422 = vadd.f32 0.0, %v1421
  %1423 = vmatmul.f32.gmra.mxu0 %v1352
  %v1424 = vpop.f32.mrf.mxu0
  %v1425 = vadd.f32 0.0, %v1424
  %1426 = vmatmul.f32.gmra.mxu0 %v1353
  %v1427 = vpop.f32.mrf.mxu0
  %v1428 = vadd.f32 0.0, %v1427
  %1429 = vmatmul.f32.gmra.mxu0 %v1354
  %v1430 = vpop.f32.mrf.mxu0
  %v1431 = vadd.f32 0.0, %v1430
  %1432 = vmatmul.f32.gmra.mxu0 %v1355
  %v1433 = vpop.f32.mrf.mxu0
  %v1434 = vadd.f32 0.0, %v1433
  %1435 = vmatmul.f32.gmra.mxu0 %v1356
  %v1436 = vpop.f32.mrf.mxu0
  %v1437 = vadd.f32 0.0, %v1436
  %1438 = vdwg.mxu0
  %1439 = vmatpush.xpose.msra.mxu0 0.0
  %1440 = vmatpush.xpose.msra.mxu0 0.0
  %1441 = vmatpush.xpose.msra.mxu0 0.0
  %1442 = vmatpush.xpose.msra.mxu0 0.0
  %1443 = vmatpush.xpose.msra.mxu0 0.0
  %1444 = vmatpush.xpose.msra.mxu0 0.0
  %1445 = vmatpush.xpose.msra.mxu0 0.0
  %1446 = vmatpush.xpose.msra.mxu0 0.0
  %1447 = vmatpush.xpose.msra.mxu0 %v1356
  %1448 = vmatpush.xpose.msra.mxu0 %v1355
  %1449 = vmatpush.xpose.msra.mxu0 %v1354
  %1450 = vmatpush.xpose.msra.mxu0 %v1353
  %1451 = vmatpush.xpose.msra.mxu0 %v1352
  %1452 = vmatpush.xpose.msra.mxu0 %v1351
  %1453 = vmatpush.xpose.msra.mxu0 %v1350
  %1454 = vmatpush.xpose.msra.mxu0 %v1349
  %1455 = vmatmul.f32.gmra.mxu0 %v1375
  %v1456 = vpop.f32.mrf.mxu0
  %v1457 = vadd.f32 %v1416, %v1456
  %1458 = vmatmul.f32.gmra.mxu0 %v1378
  %v1459 = vpop.f32.mrf.mxu0
  %v1460 = vadd.f32 %v1419, %v1459
  %1461 = vmatmul.f32.gmra.mxu0 %v1381
  %v1462 = vpop.f32.mrf.mxu0
  %v1463 = vadd.f32 %v1422, %v1462
  %1464 = vmatmul.f32.gmra.mxu0 %v1384
  %v1465 = vpop.f32.mrf.mxu0
  %v1466 = vadd.f32 %v1425, %v1465
  %1467 = vmatmul.f32.gmra.mxu0 %v1387
  %v1468 = vpop.f32.mrf.mxu0
  %v1469 = vadd.f32 %v1428, %v1468
  %1470 = vmatmul.f32.gmra.mxu0 %v1390
  %v1471 = vpop.f32.mrf.mxu0
  %v1472 = vadd.f32 %v1431, %v1471
  %1473 = vmatmul.f32.gmra.mxu0 %v1393
  %v1474 = vpop.f32.mrf.mxu0
  %v1475 = vadd.f32 %v1434, %v1474
  %1476 = vmatmul.f32.gmra.mxu0 %v1396
  %v1477 = vpop.f32.mrf.mxu0
  %v1478 = vadd.f32 %v1437, %v1477
  %1479 = vdwg.mxu0
  %v1480 = vadd.f32 %v1457, %v116
  %v1481 = vadd.f32 %v1460, %v117
  %v1482 = vadd.f32 %v1463, %v118
  %v1483 = vadd.f32 %v1466, %v119
  %v1484 = vadd.f32 %v1469, %v120
  %v1485 = vadd.f32 %v1472, %v121
  %v1486 = vadd.f32 %v1475, %v122
  %v1487 = vadd.f32 %v1478, %v123
  %v1488 = vsel %vm518, %v1480, -inf
  %1489 = vmax.xlane.f32.xlu0 %v1488
  %v1490 = vpop.xlane.xlu0 %1489
  %v1491 = vsel %vm518, %v1481, -inf
  %1492 = vmax.xlane.f32.xlu0 %v1491
  %v1493 = vpop.xlane.xlu0 %1492
  %v1494 = vsel %vm518, %v1482, -inf
  %1495 = vmax.xlane.f32.xlu0 %v1494
  %v1496 = vpop.xlane.xlu0 %1495
  %v1497 = vsel %vm518, %v1483, -inf
  %1498 = vmax.xlane.f32.xlu0 %v1497
  %v1499 = vpop.xlane.xlu0 %1498
  %v1500 = vsel %vm518, %v1484, -inf
  %1501 = vmax.xlane.f32.xlu0 %v1500
  %v1502 = vpop.xlane.xlu0 %1501
  %v1503 = vsel %vm518, %v1485, -inf
  %1504 = vmax.xlane.f32.xlu0 %v1503
  %v1505 = vpop.xlane.xlu0 %1504
  %v1506 = vsel %vm518, %v1486, -inf
  %1507 = vmax.xlane.f32.xlu0 %v1506
  %v1508 = vpop.xlane.xlu0 %1507
  %v1509 = vsel %vm518, %v1487, -inf
  %1510 = vmax.xlane.f32.xlu0 %v1509
  %v1511 = vpop.xlane.xlu0 %1510
  %v1512 = vsub.f32 %v1480, %v1490
  %v1513 = vsub.f32 %v1481, %v1493
  %v1514 = vsub.f32 %v1482, %v1496
  %v1515 = vsub.f32 %v1483, %v1499
  %v1516 = vsub.f32 %v1484, %v1502
  %v1517 = vsub.f32 %v1485, %v1505
  %v1518 = vsub.f32 %v1486, %v1508
  %v1519 = vsub.f32 %v1487, %v1511
  %v1520 = vmul.f32 %v1512, 1.442695
  %v1521 = vpow.pop %v1520
  %v1522 = vmul.f32 %v1513, 1.442695
  %v1523 = vpow.pop %v1522
  %v1524 = vmul.f32 %v1514, 1.442695
  %v1525 = vpow.pop %v1524
  %v1526 = vmul.f32 %v1515, 1.442695
  %v1527 = vpow.pop %v1526
  %v1528 = vmul.f32 %v1516, 1.442695
  %v1529 = vpow.pop %v1528
  %v1530 = vmul.f32 %v1517, 1.442695
  %v1531 = vpow.pop %v1530
  %v1532 = vmul.f32 %v1518, 1.442695
  %v1533 = vpow.pop %v1532
  %v1534 = vmul.f32 %v1519, 1.442695
  %v1535 = vpow.pop %v1534
  %v1536 = vsel %vm518, %v1521, 0.0
  %1537 = vadd.xlane.f32.xlu0 %v1536
  %v1538 = vpop.xlane.xlu0 %1537
  %v1539 = vsel %vm518, %v1523, 0.0
  %1540 = vadd.xlane.f32.xlu0 %v1539
  %v1541 = vpop.xlane.xlu0 %1540
  %v1542 = vsel %vm518, %v1525, 0.0
  %1543 = vadd.xlane.f32.xlu0 %v1542
  %v1544 = vpop.xlane.xlu0 %1543
  %v1545 = vsel %vm518, %v1527, 0.0
  %1546 = vadd.xlane.f32.xlu0 %v1545
  %v1547 = vpop.xlane.xlu0 %1546
  %v1548 = vsel %vm518, %v1529, 0.0
  %1549 = vadd.xlane.f32.xlu0 %v1548
  %v1550 = vpop.xlane.xlu0 %1549
  %v1551 = vsel %vm518, %v1531, 0.0
  %1552 = vadd.xlane.f32.xlu0 %v1551
  %v1553 = vpop.xlane.xlu0 %1552
  %v1554 = vsel %vm518, %v1533, 0.0
  %1555 = vadd.xlane.f32.xlu0 %v1554
  %v1556 = vpop.xlane.xlu0 %1555
  %v1557 = vsel %vm518, %v1535, 0.0
  %1558 = vadd.xlane.f32.xlu0 %v1557
  %v1559 = vpop.xlane.xlu0 %1558
  %v1560 = vrcp.pop %v1538
  %v1561 = vrcp.pop %v1541
  %v1562 = vrcp.pop %v1544
  %v1563 = vrcp.pop %v1547
  %v1564 = vrcp.pop %v1550
  %v1565 = vrcp.pop %v1553
  %v1566 = vrcp.pop %v1556
  %v1567 = vrcp.pop %v1559
  %v1568 = vmul.f32 %v1521, %v1560
  %v1569 = vmul.f32 %v1523, %v1561
  %v1570 = vmul.f32 %v1525, %v1562
  %v1571 = vmul.f32 %v1527, %v1563
  %v1572 = vmul.f32 %v1529, %v1564
  %v1573 = vmul.f32 %v1531, %v1565
  %v1574 = vmul.f32 %v1533, %v1566
  %v1575 = vmul.f32 %v1535, %v1567
  %1576 = vmatpush.msra.mxu0 %v139
  %1577 = vmatpush.msra.mxu0 %v138
  %1578 = vmatpush.msra.mxu0 %v137
  %1579 = vmatpush.msra.mxu0 %v136
  %1580 = vmatpush.msra.mxu0 %v135
  %1581 = vmatpush.msra.mxu0 %v134
  %1582 = vmatpush.msra.mxu0 %v133
  %1583 = vmatpush.msra.mxu0 %v132
  %1584 = vmatpush.msra.mxu0 %v131
  %1585 = vmatpush.msra.mxu0 %v130
  %1586 = vmatpush.msra.mxu0 %v129
  %1587 = vmatpush.msra.mxu0 %v128
  %1588 = vmatpush.msra.mxu0 %v127
  %1589 = vmatpush.msra.mxu0 %v126
  %1590 = vmatpush.msra.mxu0 %v125
  %1591 = vmatpush.msra.mxu0 %v124
  %1592 = vmatmul.f32.gmra.mxu0 %v1349
  %v1593 = vpop.f32.mrf.mxu0
  %v1594 = vadd.f32 %v140, %v1593
  %1595 = vmatmul.f32.gmra.mxu0 %v1350
  %v1596 = vpop.f32.mrf.mxu0
  %v1597 = vadd.f32 %v141, %v1596
  %1598 = vmatmul.f32.gmra.mxu0 %v1351
  %v1599 = vpop.f32.mrf.mxu0
  %v1600 = vadd.f32 %v142, %v1599
  %1601 = vmatmul.f32.gmra.mxu0 %v1352
  %v1602 = vpop.f32.mrf.mxu0
  %v1603 = vadd.f32 %v143, %v1602
  %1604 = vmatmul.f32.gmra.mxu0 %v1353
  %v1605 = vpop.f32.mrf.mxu0
  %v1606 = vadd.f32 %v144, %v1605
  %1607 = vmatmul.f32.gmra.mxu0 %v1354
  %v1608 = vpop.f32.mrf.mxu0
  %v1609 = vadd.f32 %v145, %v1608
  %1610 = vmatmul.f32.gmra.mxu0 %v1355
  %v1611 = vpop.f32.mrf.mxu0
  %v1612 = vadd.f32 %v146, %v1611
  %1613 = vmatmul.f32.gmra.mxu0 %v1356
  %v1614 = vpop.f32.mrf.mxu0
  %v1615 = vadd.f32 %v147, %v1614
  %1616 = vdwg.mxu0
  %v1618 = vsel %vm518, %v1568, 0
  %v1621 = vsel %vm518, %v1569, 0
  %v1624 = vsel %vm518, %v1570, 0
  %v1627 = vsel %vm518, %v1571, 0
  %v1630 = vsel %vm518, %v1572, 0
  %v1633 = vsel %vm518, %v1573, 0
  %v1636 = vsel %vm518, %v1574, 0
  %v1639 = vsel %vm518, %v1575, 0
  %1641 = vmatpush.msra.mxu0 0.0
  %1642 = vmatpush.msra.mxu0 0.0
  %1643 = vmatpush.msra.mxu0 0.0
  %1644 = vmatpush.msra.mxu0 0.0
  %1645 = vmatpush.msra.mxu0 0.0
  %1646 = vmatpush.msra.mxu0 0.0
  %1647 = vmatpush.msra.mxu0 0.0
  %1648 = vmatpush.msra.mxu0 0.0
  %1649 = vmatpush.msra.mxu0 %v1615
  %1650 = vmatpush.msra.mxu0 %v1612
  %1651 = vmatpush.msra.mxu0 %v1609
  %1652 = vmatpush.msra.mxu0 %v1606
  %1653 = vmatpush.msra.mxu0 %v1603
  %1654 = vmatpush.msra.mxu0 %v1600
  %1655 = vmatpush.msra.mxu0 %v1597
  %1656 = vmatpush.msra.mxu0 %v1594
  %1657 = vmatmul.f32.gmra.mxu0 %v1618
  %v1658 = vpop.f32.mrf.mxu0
  %v1659 = vadd.f32 0.0, %v1658
  %1660 = vmatmul.f32.gmra.mxu0 %v1621
  %v1661 = vpop.f32.mrf.mxu0
  %v1662 = vadd.f32 0.0, %v1661
  %1663 = vmatmul.f32.gmra.mxu0 %v1624
  %v1664 = vpop.f32.mrf.mxu0
  %v1665 = vadd.f32 0.0, %v1664
  %1666 = vmatmul.f32.gmra.mxu0 %v1627
  %v1667 = vpop.f32.mrf.mxu0
  %v1668 = vadd.f32 0.0, %v1667
  %1669 = vmatmul.f32.gmra.mxu0 %v1630
  %v1670 = vpop.f32.mrf.mxu0
  %v1671 = vadd.f32 0.0, %v1670
  %1672 = vmatmul.f32.gmra.mxu0 %v1633
  %v1673 = vpop.f32.mrf.mxu0
  %v1674 = vadd.f32 0.0, %v1673
  %1675 = vmatmul.f32.gmra.mxu0 %v1636
  %v1676 = vpop.f32.mrf.mxu0
  %v1677 = vadd.f32 0.0, %v1676
  %1678 = vmatmul.f32.gmra.mxu0 %v1639
  %v1679 = vpop.f32.mrf.mxu0
  %v1680 = vadd.f32 0.0, %v1679
  %1681 = vdwg.mxu0
  %v1682 = vmul.f32 %v1659, %v68
  %v1683 = vmul.f32 %v1662, %v69
  %v1684 = vmul.f32 %v1665, %v70
  %v1685 = vmul.f32 %v1668, %v71
  %v1686 = vmul.f32 %v1671, %v72
  %v1687 = vmul.f32 %v1674, %v73
  %v1688 = vmul.f32 %v1677, %v74
  %v1689 = vmul.f32 %v1680, %v75
  %1690 = vmatpush.msra.mxu0 %v163
  %1691 = vmatpush.msra.mxu0 %v162
  %1692 = vmatpush.msra.mxu0 %v161
  %1693 = vmatpush.msra.mxu0 %v160
  %1694 = vmatpush.msra.mxu0 %v159
  %1695 = vmatpush.msra.mxu0 %v158
  %1696 = vmatpush.msra.mxu0 %v157
  %1697 = vmatpush.msra.mxu0 %v156
  %1698 = vmatpush.msra.mxu0 %v155
  %1699 = vmatpush.msra.mxu0 %v154
  %1700 = vmatpush.msra.mxu0 %v153
  %1701 = vmatpush.msra.mxu0 %v152
  %1702 = vmatpush.msra.mxu0 %v151
  %1703 = vmatpush.msra.mxu0 %v150
  %1704 = vmatpush.msra.mxu0 %v149
  %1705 = vmatpush.msra.mxu0 %v148
  %1706 = vmatmul.f32.gmra.mxu0 %v1682
  %v1707 = vpop.f32.mrf.mxu0
  %v1708 = vadd.f32 0.0, %v1707
  %1709 = vmatmul.f32.gmra.mxu0 %v1683
  %v1710 = vpop.f32.mrf.mxu0
  %v1711 = vadd.f32 0.0, %v1710
  %1712 = vmatmul.f32.gmra.mxu0 %v1684
  %v1713 = vpop.f32.mrf.mxu0
  %v1714 = vadd.f32 0.0, %v1713
  %1715 = vmatmul.f32.gmra.mxu0 %v1685
  %v1716 = vpop.f32.mrf.mxu0
  %v1717 = vadd.f32 0.0, %v1716
  %1718 = vmatmul.f32.gmra.mxu0 %v1686
  %v1719 = vpop.f32.mrf.mxu0
  %v1720 = vadd.f32 0.0, %v1719
  %1721 = vmatmul.f32.gmra.mxu0 %v1687
  %v1722 = vpop.f32.mrf.mxu0
  %v1723 = vadd.f32 0.0, %v1722
  %1724 = vmatmul.f32.gmra.mxu0 %v1688
  %v1725 = vpop.f32.mrf.mxu0
  %v1726 = vadd.f32 0.0, %v1725
  %1727 = vmatmul.f32.gmra.mxu0 %v1689
  %v1728 = vpop.f32.mrf.mxu0
  %v1729 = vadd.f32 0.0, %v1728
  %1730 = vdwg.mxu0
  %v1731 = vadd.f32 %v763, %v1708
  %v1732 = vadd.f32 %v763, %v1711
  %v1733 = vadd.f32 %v1731, %v1714
  %v1734 = vadd.f32 %v1732, %v1717
  %v1735 = vadd.f32 %v1733, %v1720
  %v1736 = vadd.f32 %v1734, %v1723
  %v1737 = vadd.f32 %v1735, %v1726
  %v1738 = vadd.f32 %v1736, %v1729
  %v1739 = vadd.f32 %v1737, %v1300
  %v1740 = vadd.f32 %v1738, %v1301
  %v1741 = vsel %vm331, %v1739, 0.0
  %1742 = vadd.xlane.f32.xlu0 %v1741
  %v1743 = vpop.xlane.xlu0 %1742
  %v1744 = vsel %vm331, %v1740, 0.0
  %1745 = vadd.xlane.f32.xlu0 %v1744
  %v1746 = vpop.xlane.xlu0 %1745
  %v1747 = vmul.f32 %v1743, %v787
  %v1748 = vmul.f32 %v1746, %v787
  %v1749 = vsub.f32 %v1739, %v1747
  %v1750 = vsub.f32 %v1740, %v1748
  %v1751 = vmul.f32 %v1749, %v1749
  %v1752 = vmul.f32 %v1750, %v1750
  %v1753 = vsel %vm331, %v1751, 0.0
  %1754 = vadd.xlane.f32.xlu0 %v1753
  %v1755 = vpop.xlane.xlu0 %1754
  %v1756 = vsel %vm331, %v1752, 0.0
  %1757 = vadd.xlane.f32.xlu0 %v1756
  %v1758 = vpop.xlane.xlu0 %1757
  %v1759 = vmul.f32 %v1755, %v787
  %v1760 = vmul.f32 %v1758, %v787
  %v1761 = vadd.f32 %v1759, 1e-05
  %v1762 = vadd.f32 %v1760, 1e-05
  %v1763 = vrsqrt.pop %v1761
  %v1764 = vmul.f32 %v1763, %v1761
  %v1765 = vmul.f32 %v1764, %v1763
  %v1766 = vmul.f32 0.5, %v1765
  %v1767 = vsub.f32 1.5, %v1766
  %v1768 = vmul.f32 %v1763, %v1767
  %vm1769 = vweird.f32 %v1761
  %vm1770 = vweird.f32 %v1763
  %vm1771 = vmor %vm1769, %vm1770
  %v1772 = vsel %vm1771, %v1763, %v1768
  %v1773 = vrsqrt.pop %v1762
  %v1774 = vmul.f32 %v1773, %v1762
  %v1775 = vmul.f32 %v1774, %v1773
  %v1776 = vmul.f32 0.5, %v1775
  %v1777 = vsub.f32 1.5, %v1776
  %v1778 = vmul.f32 %v1773, %v1777
  %vm1779 = vweird.f32 %v1762
  %vm1780 = vweird.f32 %v1773
  %vm1781 = vmor %vm1779, %vm1780
  %v1782 = vsel %vm1781, %v1773, %v1778
  %v1783 = vmul.f32 %v1749, %v1772
  %v1784 = vmul.f32 %v1750, %v1782
  %v1785 = vmul.f32 %v1783, %v827
  %v1786 = vmul.f32 %v1784, %v827
  %v1787 = vadd.f32 %v1785, %v832
  %v1788 = vadd.f32 %v1786, %v832
  %v1790 = vsel %vm331, %v1787, 0
  %v1793 = vsel %vm331, %v1788, 0
  %1795 = vmatpush.msra.mxu0 0.0
  %1796 = vmatpush.msra.mxu0 0.0
  %1797 = vmatpush.msra.mxu0 0.0
  %1798 = vmatpush.msra.mxu0 0.0
  %1799 = vmatpush.msra.mxu0 0.0
  %1800 = vmatpush.msra.mxu0 0.0
  %1801 = vmatpush.msra.mxu0 0.0
  %1802 = vmatpush.msra.mxu0 0.0
  %1803 = vmatpush.msra.mxu0 0.0
  %1804 = vmatpush.msra.mxu0 0.0
  %1805 = vmatpush.msra.mxu0 0.0
  %1806 = vmatpush.msra.mxu0 0.0
  %1807 = vmatpush.msra.mxu0 %v191
  %1808 = vmatpush.msra.mxu0 %v183
  %1809 = vmatpush.msra.mxu0 %v175
  %1810 = vmatpush.msra.mxu0 %v167
  %1811 = vmatmul.f32.gmra.mxu0 %v1790
  %v1812 = vpop.f32.mrf.mxu0
  %v1813 = vadd.f32 %v837, %v1812
  %1814 = vmatmul.f32.gmra.mxu0 %v1793
  %v1815 = vpop.f32.mrf.mxu0
  %v1816 = vadd.f32 %v837, %v1815
  %1817 = vdwg.mxu0
  %1818 = vmatpush.msra.mxu0 0.0
  %1819 = vmatpush.msra.mxu0 0.0
  %1820 = vmatpush.msra.mxu0 0.0
  %1821 = vmatpush.msra.mxu0 0.0
  %1822 = vmatpush.msra.mxu0 0.0
  %1823 = vmatpush.msra.mxu0 0.0
  %1824 = vmatpush.msra.mxu0 0.0
  %1825 = vmatpush.msra.mxu0 0.0
  %1826 = vmatpush.msra.mxu0 0.0
  %1827 = vmatpush.msra.mxu0 0.0
  %1828 = vmatpush.msra.mxu0 0.0
  %1829 = vmatpush.msra.mxu0 0.0
  %1830 = vmatpush.msra.mxu0 %v192
  %1831 = vmatpush.msra.mxu0 %v184
  %1832 = vmatpush.msra.mxu0 %v176
  %1833 = vmatpush.msra.mxu0 %v168
  %1834 = vmatmul.f32.gmra.mxu0 %v1790
  %v1835 = vpop.f32.mrf.mxu0
  %v1836 = vadd.f32 %v838, %v1835
  %1837 = vmatmul.f32.gmra.mxu0 %v1793
  %v1838 = vpop.f32.mrf.mxu0
  %v1839 = vadd.f32 %v838, %v1838
  %1840 = vdwg.mxu0
  %1841 = vmatpush.msra.mxu0 0.0
  %1842 = vmatpush.msra.mxu0 0.0
  %1843 = vmatpush.msra.mxu0 0.0
  %1844 = vmatpush.msra.mxu0 0.0
  %1845 = vmatpush.msra.mxu0 0.0
  %1846 = vmatpush.msra.mxu0 0.0
  %1847 = vmatpush.msra.mxu0 0.0
  %1848 = vmatpush.msra.mxu0 0.0
  %1849 = vmatpush.msra.mxu0 0.0
  %1850 = vmatpush.msra.mxu0 0.0
  %1851 = vmatpush.msra.mxu0 0.0
  %1852 = vmatpush.msra.mxu0 0.0
  %1853 = vmatpush.msra.mxu0 %v193
  %1854 = vmatpush.msra.mxu0 %v185
  %1855 = vmatpush.msra.mxu0 %v177
  %1856 = vmatpush.msra.mxu0 %v169
  %1857 = vmatmul.f32.gmra.mxu0 %v1790
  %v1858 = vpop.f32.mrf.mxu0
  %v1859 = vadd.f32 %v839, %v1858
  %1860 = vmatmul.f32.gmra.mxu0 %v1793
  %v1861 = vpop.f32.mrf.mxu0
  %v1862 = vadd.f32 %v839, %v1861
  %1863 = vdwg.mxu0
  %1864 = vmatpush.msra.mxu0 0.0
  %1865 = vmatpush.msra.mxu0 0.0
  %1866 = vmatpush.msra.mxu0 0.0
  %1867 = vmatpush.msra.mxu0 0.0
  %1868 = vmatpush.msra.mxu0 0.0
  %1869 = vmatpush.msra.mxu0 0.0
  %1870 = vmatpush.msra.mxu0 0.0
  %1871 = vmatpush.msra.mxu0 0.0
  %1872 = vmatpush.msra.mxu0 0.0
  %1873 = vmatpush.msra.mxu0 0.0
  %1874 = vmatpush.msra.mxu0 0.0
  %1875 = vmatpush.msra.mxu0 0.0
  %1876 = vmatpush.msra.mxu0 %v194
  %1877 = vmatpush.msra.mxu0 %v186
  %1878 = vmatpush.msra.mxu0 %v178
  %1879 = vmatpush.msra.mxu0 %v170
  %1880 = vmatmul.f32.gmra.mxu0 %v1790
  %v1881 = vpop.f32.mrf.mxu0
  %v1882 = vadd.f32 %v840, %v1881
  %1883 = vmatmul.f32.gmra.mxu0 %v1793
  %v1884 = vpop.f32.mrf.mxu0
  %v1885 = vadd.f32 %v840, %v1884
  %1886 = vdwg.mxu0
  %1887 = vmatpush.msra.mxu0 0.0
  %1888 = vmatpush.msra.mxu0 0.0
  %1889 = vmatpush.msra.mxu0 0.0
  %1890 = vmatpush.msra.mxu0 0.0
  %1891 = vmatpush.msra.mxu0 0.0
  %1892 = vmatpush.msra.mxu0 0.0
  %1893 = vmatpush.msra.mxu0 0.0
  %1894 = vmatpush.msra.mxu0 0.0
  %1895 = vmatpush.msra.mxu0 0.0
  %1896 = vmatpush.msra.mxu0 0.0
  %1897 = vmatpush.msra.mxu0 0.0
  %1898 = vmatpush.msra.mxu0 0.0
  %1899 = vmatpush.msra.mxu0 %v195
  %1900 = vmatpush.msra.mxu0 %v187
  %1901 = vmatpush.msra.mxu0 %v179
  %1902 = vmatpush.msra.mxu0 %v171
  %1903 = vmatmul.f32.gmra.mxu0 %v1790
  %v1904 = vpop.f32.mrf.mxu0
  %v1905 = vadd.f32 %v841, %v1904
  %1906 = vmatmul.f32.gmra.mxu0 %v1793
  %v1907 = vpop.f32.mrf.mxu0
  %v1908 = vadd.f32 %v841, %v1907
  %1909 = vdwg.mxu0
  %1910 = vmatpush.msra.mxu0 0.0
  %1911 = vmatpush.msra.mxu0 0.0
  %1912 = vmatpush.msra.mxu0 0.0
  %1913 = vmatpush.msra.mxu0 0.0
  %1914 = vmatpush.msra.mxu0 0.0
  %1915 = vmatpush.msra.mxu0 0.0
  %1916 = vmatpush.msra.mxu0 0.0
  %1917 = vmatpush.msra.mxu0 0.0
  %1918 = vmatpush.msra.mxu0 0.0
  %1919 = vmatpush.msra.mxu0 0.0
  %1920 = vmatpush.msra.mxu0 0.0
  %1921 = vmatpush.msra.mxu0 0.0
  %1922 = vmatpush.msra.mxu0 %v196
  %1923 = vmatpush.msra.mxu0 %v188
  %1924 = vmatpush.msra.mxu0 %v180
  %1925 = vmatpush.msra.mxu0 %v172
  %1926 = vmatmul.f32.gmra.mxu0 %v1790
  %v1927 = vpop.f32.mrf.mxu0
  %v1928 = vadd.f32 %v842, %v1927
  %1929 = vmatmul.f32.gmra.mxu0 %v1793
  %v1930 = vpop.f32.mrf.mxu0
  %v1931 = vadd.f32 %v842, %v1930
  %1932 = vdwg.mxu0
  %1933 = vmatpush.msra.mxu0 0.0
  %1934 = vmatpush.msra.mxu0 0.0
  %1935 = vmatpush.msra.mxu0 0.0
  %1936 = vmatpush.msra.mxu0 0.0
  %1937 = vmatpush.msra.mxu0 0.0
  %1938 = vmatpush.msra.mxu0 0.0
  %1939 = vmatpush.msra.mxu0 0.0
  %1940 = vmatpush.msra.mxu0 0.0
  %1941 = vmatpush.msra.mxu0 0.0
  %1942 = vmatpush.msra.mxu0 0.0
  %1943 = vmatpush.msra.mxu0 0.0
  %1944 = vmatpush.msra.mxu0 0.0
  %1945 = vmatpush.msra.mxu0 %v197
  %1946 = vmatpush.msra.mxu0 %v189
  %1947 = vmatpush.msra.mxu0 %v181
  %1948 = vmatpush.msra.mxu0 %v173
  %1949 = vmatmul.f32.gmra.mxu0 %v1790
  %v1950 = vpop.f32.mrf.mxu0
  %v1951 = vadd.f32 %v843, %v1950
  %1952 = vmatmul.f32.gmra.mxu0 %v1793
  %v1953 = vpop.f32.mrf.mxu0
  %v1954 = vadd.f32 %v843, %v1953
  %1955 = vdwg.mxu0
  %1956 = vmatpush.msra.mxu0 0.0
  %1957 = vmatpush.msra.mxu0 0.0
  %1958 = vmatpush.msra.mxu0 0.0
  %1959 = vmatpush.msra.mxu0 0.0
  %1960 = vmatpush.msra.mxu0 0.0
  %1961 = vmatpush.msra.mxu0 0.0
  %1962 = vmatpush.msra.mxu0 0.0
  %1963 = vmatpush.msra.mxu0 0.0
  %1964 = vmatpush.msra.mxu0 0.0
  %1965 = vmatpush.msra.mxu0 0.0
  %1966 = vmatpush.msra.mxu0 0.0
  %1967 = vmatpush.msra.mxu0 0.0
  %1968 = vmatpush.msra.mxu0 %v198
  %1969 = vmatpush.msra.mxu0 %v190
  %1970 = vmatpush.msra.mxu0 %v182
  %1971 = vmatpush.msra.mxu0 %v174
  %1972 = vmatmul.f32.gmra.mxu0 %v1790
  %v1973 = vpop.f32.mrf.mxu0
  %v1974 = vadd.f32 %v844, %v1973
  %1975 = vmatmul.f32.gmra.mxu0 %v1793
  %v1976 = vpop.f32.mrf.mxu0
  %v1977 = vadd.f32 %v844, %v1976
  %1978 = vdwg.mxu0
  %v1979 = vmax.f32 %v1813, 0.0
  %v1980 = vmax.f32 %v1836, 0.0
  %v1981 = vmax.f32 %v1859, 0.0
  %v1982 = vmax.f32 %v1882, 0.0
  %v1983 = vmax.f32 %v1905, 0.0
  %v1984 = vmax.f32 %v1928, 0.0
  %v1985 = vmax.f32 %v1951, 0.0
  %v1986 = vmax.f32 %v1974, 0.0
  %v1987 = vmax.f32 %v1816, 0.0
  %v1988 = vmax.f32 %v1839, 0.0
  %v1989 = vmax.f32 %v1862, 0.0
  %v1990 = vmax.f32 %v1885, 0.0
  %v1991 = vmax.f32 %v1908, 0.0
  %v1992 = vmax.f32 %v1931, 0.0
  %v1993 = vmax.f32 %v1954, 0.0
  %v1994 = vmax.f32 %v1977, 0.0
  %1995 = vmatpush.msra.mxu0 %v215
  %1996 = vmatpush.msra.mxu0 %v214
  %1997 = vmatpush.msra.mxu0 %v213
  %1998 = vmatpush.msra.mxu0 %v212
  %1999 = vmatpush.msra.mxu0 %v211
  %2000 = vmatpush.msra.mxu0 %v210
  %2001 = vmatpush.msra.mxu0 %v209
  %2002 = vmatpush.msra.mxu0 %v208
  %2003 = vmatpush.msra.mxu0 %v207
  %2004 = vmatpush.msra.mxu0 %v206
  %2005 = vmatpush.msra.mxu0 %v205
  %2006 = vmatpush.msra.mxu0 %v204
  %2007 = vmatpush.msra.mxu0 %v203
  %2008 = vmatpush.msra.mxu0 %v202
  %2009 = vmatpush.msra.mxu0 %v201
  %2010 = vmatpush.msra.mxu0 %v200
  %2011 = vmatmul.f32.gmra.mxu0 %v1979
  %v2012 = vpop.f32.mrf.mxu0
  %v2013 = vadd.f32 %v1060, %v2012
  %2014 = vmatmul.f32.gmra.mxu0 %v1987
  %v2015 = vpop.f32.mrf.mxu0
  %v2016 = vadd.f32 %v1060, %v2015
  %2017 = vdwg.mxu0
  %2018 = vmatpush.msra.mxu0 %v231
  %2019 = vmatpush.msra.mxu0 %v230
  %2020 = vmatpush.msra.mxu0 %v229
  %2021 = vmatpush.msra.mxu0 %v228
  %2022 = vmatpush.msra.mxu0 %v227
  %2023 = vmatpush.msra.mxu0 %v226
  %2024 = vmatpush.msra.mxu0 %v225
  %2025 = vmatpush.msra.mxu0 %v224
  %2026 = vmatpush.msra.mxu0 %v223
  %2027 = vmatpush.msra.mxu0 %v222
  %2028 = vmatpush.msra.mxu0 %v221
  %2029 = vmatpush.msra.mxu0 %v220
  %2030 = vmatpush.msra.mxu0 %v219
  %2031 = vmatpush.msra.mxu0 %v218
  %2032 = vmatpush.msra.mxu0 %v217
  %2033 = vmatpush.msra.mxu0 %v216
  %2034 = vmatmul.f32.gmra.mxu0 %v1980
  %v2035 = vpop.f32.mrf.mxu0
  %v2036 = vadd.f32 %v2013, %v2035
  %2037 = vmatmul.f32.gmra.mxu0 %v1988
  %v2038 = vpop.f32.mrf.mxu0
  %v2039 = vadd.f32 %v2016, %v2038
  %2040 = vdwg.mxu0
  %2041 = vmatpush.msra.mxu0 %v247
  %2042 = vmatpush.msra.mxu0 %v246
  %2043 = vmatpush.msra.mxu0 %v245
  %2044 = vmatpush.msra.mxu0 %v244
  %2045 = vmatpush.msra.mxu0 %v243
  %2046 = vmatpush.msra.mxu0 %v242
  %2047 = vmatpush.msra.mxu0 %v241
  %2048 = vmatpush.msra.mxu0 %v240
  %2049 = vmatpush.msra.mxu0 %v239
  %2050 = vmatpush.msra.mxu0 %v238
  %2051 = vmatpush.msra.mxu0 %v237
  %2052 = vmatpush.msra.mxu0 %v236
  %2053 = vmatpush.msra.mxu0 %v235
  %2054 = vmatpush.msra.mxu0 %v234
  %2055 = vmatpush.msra.mxu0 %v233
  %2056 = vmatpush.msra.mxu0 %v232
  %2057 = vmatmul.f32.gmra.mxu0 %v1981
  %v2058 = vpop.f32.mrf.mxu0
  %v2059 = vadd.f32 %v2036, %v2058
  %2060 = vmatmul.f32.gmra.mxu0 %v1989
  %v2061 = vpop.f32.mrf.mxu0
  %v2062 = vadd.f32 %v2039, %v2061
  %2063 = vdwg.mxu0
  %2064 = vmatpush.msra.mxu0 %v263
  %2065 = vmatpush.msra.mxu0 %v262
  %2066 = vmatpush.msra.mxu0 %v261
  %2067 = vmatpush.msra.mxu0 %v260
  %2068 = vmatpush.msra.mxu0 %v259
  %2069 = vmatpush.msra.mxu0 %v258
  %2070 = vmatpush.msra.mxu0 %v257
  %2071 = vmatpush.msra.mxu0 %v256
  %2072 = vmatpush.msra.mxu0 %v255
  %2073 = vmatpush.msra.mxu0 %v254
  %2074 = vmatpush.msra.mxu0 %v253
  %2075 = vmatpush.msra.mxu0 %v252
  %2076 = vmatpush.msra.mxu0 %v251
  %2077 = vmatpush.msra.mxu0 %v250
  %2078 = vmatpush.msra.mxu0 %v249
  %2079 = vmatpush.msra.mxu0 %v248
  %2080 = vmatmul.f32.gmra.mxu0 %v1982
  %v2081 = vpop.f32.mrf.mxu0
  %v2082 = vadd.f32 %v2059, %v2081
  %2083 = vmatmul.f32.gmra.mxu0 %v1990
  %v2084 = vpop.f32.mrf.mxu0
  %v2085 = vadd.f32 %v2062, %v2084
  %2086 = vdwg.mxu0
  %2087 = vmatpush.msra.mxu0 %v279
  %2088 = vmatpush.msra.mxu0 %v278
  %2089 = vmatpush.msra.mxu0 %v277
  %2090 = vmatpush.msra.mxu0 %v276
  %2091 = vmatpush.msra.mxu0 %v275
  %2092 = vmatpush.msra.mxu0 %v274
  %2093 = vmatpush.msra.mxu0 %v273
  %2094 = vmatpush.msra.mxu0 %v272
  %2095 = vmatpush.msra.mxu0 %v271
  %2096 = vmatpush.msra.mxu0 %v270
  %2097 = vmatpush.msra.mxu0 %v269
  %2098 = vmatpush.msra.mxu0 %v268
  %2099 = vmatpush.msra.mxu0 %v267
  %2100 = vmatpush.msra.mxu0 %v266
  %2101 = vmatpush.msra.mxu0 %v265
  %2102 = vmatpush.msra.mxu0 %v264
  %2103 = vmatmul.f32.gmra.mxu0 %v1983
  %v2104 = vpop.f32.mrf.mxu0
  %v2105 = vadd.f32 %v2082, %v2104
  %2106 = vmatmul.f32.gmra.mxu0 %v1991
  %v2107 = vpop.f32.mrf.mxu0
  %v2108 = vadd.f32 %v2085, %v2107
  %2109 = vdwg.mxu0
  %2110 = vmatpush.msra.mxu0 %v295
  %2111 = vmatpush.msra.mxu0 %v294
  %2112 = vmatpush.msra.mxu0 %v293
  %2113 = vmatpush.msra.mxu0 %v292
  %2114 = vmatpush.msra.mxu0 %v291
  %2115 = vmatpush.msra.mxu0 %v290
  %2116 = vmatpush.msra.mxu0 %v289
  %2117 = vmatpush.msra.mxu0 %v288
  %2118 = vmatpush.msra.mxu0 %v287
  %2119 = vmatpush.msra.mxu0 %v286
  %2120 = vmatpush.msra.mxu0 %v285
  %2121 = vmatpush.msra.mxu0 %v284
  %2122 = vmatpush.msra.mxu0 %v283
  %2123 = vmatpush.msra.mxu0 %v282
  %2124 = vmatpush.msra.mxu0 %v281
  %2125 = vmatpush.msra.mxu0 %v280
  %2126 = vmatmul.f32.gmra.mxu0 %v1984
  %v2127 = vpop.f32.mrf.mxu0
  %v2128 = vadd.f32 %v2105, %v2127
  %2129 = vmatmul.f32.gmra.mxu0 %v1992
  %v2130 = vpop.f32.mrf.mxu0
  %v2131 = vadd.f32 %v2108, %v2130
  %2132 = vdwg.mxu0
  %2133 = vmatpush.msra.mxu0 %v311
  %2134 = vmatpush.msra.mxu0 %v310
  %2135 = vmatpush.msra.mxu0 %v309
  %2136 = vmatpush.msra.mxu0 %v308
  %2137 = vmatpush.msra.mxu0 %v307
  %2138 = vmatpush.msra.mxu0 %v306
  %2139 = vmatpush.msra.mxu0 %v305
  %2140 = vmatpush.msra.mxu0 %v304
  %2141 = vmatpush.msra.mxu0 %v303
  %2142 = vmatpush.msra.mxu0 %v302
  %2143 = vmatpush.msra.mxu0 %v301
  %2144 = vmatpush.msra.mxu0 %v300
  %2145 = vmatpush.msra.mxu0 %v299
  %2146 = vmatpush.msra.mxu0 %v298
  %2147 = vmatpush.msra.mxu0 %v297
  %2148 = vmatpush.msra.mxu0 %v296
  %2149 = vmatmul.f32.gmra.mxu0 %v1985
  %v2150 = vpop.f32.mrf.mxu0
  %v2151 = vadd.f32 %v2128, %v2150
  %2152 = vmatmul.f32.gmra.mxu0 %v1993
  %v2153 = vpop.f32.mrf.mxu0
  %v2154 = vadd.f32 %v2131, %v2153
  %2155 = vdwg.mxu0
  %2156 = vmatpush.msra.mxu0 %v327
  %2157 = vmatpush.msra.mxu0 %v326
  %2158 = vmatpush.msra.mxu0 %v325
  %2159 = vmatpush.msra.mxu0 %v324
  %2160 = vmatpush.msra.mxu0 %v323
  %2161 = vmatpush.msra.mxu0 %v322
  %2162 = vmatpush.msra.mxu0 %v321
  %2163 = vmatpush.msra.mxu0 %v320
  %2164 = vmatpush.msra.mxu0 %v319
  %2165 = vmatpush.msra.mxu0 %v318
  %2166 = vmatpush.msra.mxu0 %v317
  %2167 = vmatpush.msra.mxu0 %v316
  %2168 = vmatpush.msra.mxu0 %v315
  %2169 = vmatpush.msra.mxu0 %v314
  %2170 = vmatpush.msra.mxu0 %v313
  %2171 = vmatpush.msra.mxu0 %v312
  %2172 = vmatmul.f32.gmra.mxu0 %v1986
  %v2173 = vpop.f32.mrf.mxu0
  %v2174 = vadd.f32 %v2151, %v2173
  %2175 = vmatmul.f32.gmra.mxu0 %v1994
  %v2176 = vpop.f32.mrf.mxu0
  %v2177 = vadd.f32 %v2154, %v2176
  %2178 = vdwg.mxu0
  %v2179 = vadd.f32 %v2174, %v1787
  %v2180 = vadd.f32 %v2177, %v1788
  %v2181 = vsel %vm331, %v2179, 0.0
  %2182 = vadd.xlane.f32.xlu0 %v2181
  %v2183 = vpop.xlane.xlu0 %2182
  %v2184 = vsel %vm331, %v2180, 0.0
  %2185 = vadd.xlane.f32.xlu0 %v2184
  %v2186 = vpop.xlane.xlu0 %2185
  %v2187 = vmul.f32 %v2183, %v787
  %v2188 = vmul.f32 %v2186, %v787
  %v2189 = vsub.f32 %v2179, %v2187
  %v2190 = vsub.f32 %v2180, %v2188
  %v2191 = vmul.f32 %v2189, %v2189
  %v2192 = vmul.f32 %v2190, %v2190
  %v2193 = vsel %vm331, %v2191, 0.0
  %2194 = vadd.xlane.f32.xlu0 %v2193
  %v2195 = vpop.xlane.xlu0 %2194
  %v2196 = vsel %vm331, %v2192, 0.0
  %2197 = vadd.xlane.f32.xlu0 %v2196
  %v2198 = vpop.xlane.xlu0 %2197
  %v2199 = vmul.f32 %v2195, %v787
  %v2200 = vmul.f32 %v2198, %v787
  %v2201 = vadd.f32 %v2199, 1e-05
  %v2202 = vadd.f32 %v2200, 1e-05
  %v2203 = vrsqrt.pop %v2201
  %v2204 = vmul.f32 %v2203, %v2201
  %v2205 = vmul.f32 %v2204, %v2203
  %v2206 = vmul.f32 0.5, %v2205
  %v2207 = vsub.f32 1.5, %v2206
  %v2208 = vmul.f32 %v2203, %v2207
  %vm2209 = vweird.f32 %v2201
  %vm2210 = vweird.f32 %v2203
  %vm2211 = vmor %vm2209, %vm2210
  %v2212 = vsel %vm2211, %v2203, %v2208
  %v2213 = vrsqrt.pop %v2202
  %v2214 = vmul.f32 %v2213, %v2202
  %v2215 = vmul.f32 %v2214, %v2213
  %v2216 = vmul.f32 0.5, %v2215
  %v2217 = vsub.f32 1.5, %v2216
  %v2218 = vmul.f32 %v2213, %v2217
  %vm2219 = vweird.f32 %v2202
  %vm2220 = vweird.f32 %v2213
  %vm2221 = vmor %vm2219, %vm2220
  %v2222 = vsel %vm2221, %v2213, %v2218
  %v2223 = vmul.f32 %v2189, %v2212
  %v2224 = vmul.f32 %v2190, %v2222
  %v2225 = vmul.f32 %v2223, %v1293
  %v2226 = vmul.f32 %v2224, %v1293
  %v2227 = vadd.f32 %v2225, %v1298
  %v2228 = vadd.f32 %v2226, %v1298
  %2229 = vst.msk [vmem:[%s19] sm:$0xff] %vm331, %v2227
  %2230 = vst.msk [vmem:[%s19 + $0x8] sm:$0xff] %vm331, %v2228
  // Predicated region
  $region78: #{model_forward.1} parent=0 // pred_check
    _
  $region79: #{model_forward.1} parent=0 // pred_check_branch
    %2232 = sbr.rel (0) target = $region81
  $region80: #{model_forward.1} parent=0 // pred_region
    _
  $region81: #{model_forward.1} parent=0 // pred_fallthru
    _
  // Predicated region
  $region82: #{model_forward.1} parent=0 // pred_check
    _
  $region83: #{model_forward.1} parent=0 // pred_check_branch
    %2234 = sbr.rel (0) target = $region85
  $region84: #{model_forward.1} parent=0 // pred_region
    _
  $region85: #{model_forward.1} parent=0 // pred_fallthru
    _

</llo_original>
